<compile_context>
chip_gen: v7x
topology: tpu7x:2x2x1
jax: 0.10.0
libtpu: 0.0.40
codegen_flags: <defaults>
</compile_context>

<pallas_src>
import functools

import jax
import jax.numpy as jnp
from jax.experimental import pallas as pl
from jax.experimental.pallas import tpu as pltpu


# ----------------------------- Pallas kernel --------------------------------

def _dnb_fc_kernel(x_ref, w1_ref, b1_ref, wh_ref, bh_ref, wo_ref, bo_ref,
                   out_ref, *, action_space):
    # Layer 1: (TB, K_pad) @ (K_pad, dim) -- BN/bias/score-norm pre-folded.
    h = jnp.dot(x_ref[...], w1_ref[...], preferred_element_type=jnp.float32)
    h = jnp.maximum(h + b1_ref[...], 0.0)

    # Layers 2..6: stacked (5, dim, dim) weights, statically unrolled.
    for l in range(5):
        h = jnp.dot(h.astype(jnp.bfloat16), wh_ref[l],
                    preferred_element_type=jnp.float32)
        h = jnp.maximum(h + bh_ref[l], 0.0)
        # Dropout: identity in eval mode.

    # Merged policy+value head: lanes [0, A) policy logits, lane A value
    # logit, lanes (A, 128) zero padding.
    logits = jnp.dot(h.astype(jnp.bfloat16), wo_ref[...],
                     preferred_element_type=jnp.float32) + bo_ref[...]

    lane = jax.lax.broadcasted_iota(jnp.int32, logits.shape, 1)
    pmask = lane < action_space
    neg_inf = jnp.float32(-jnp.inf)

    # Numerically stable log_softmax over the policy lanes only.
    m = jnp.max(jnp.where(pmask, logits, neg_inf), axis=-1, keepdims=True)
    z = logits - m
    lse = jnp.log(jnp.sum(jnp.where(pmask, jnp.exp(z), 0.0),
                          axis=-1, keepdims=True))
    logp = z - lse

    # Value head: tanh on the single value lane only (one EUP column).
    vt = jnp.tanh(logits[:, action_space:action_space + 1])   # (TB, 1)

    out = jnp.where(pmask, logp, jnp.where(lane == action_space, vt, 0.0))
    out_ref[...] = out.astype(out_ref.dtype)   # single lane-dense (TB,128) store


# ----------------------------- Parameter setup ------------------------------

def _linear_init(key, fan_in, fan_out):
    """PyTorch nn.Linear default init: U(-1/sqrt(fan_in), 1/sqrt(fan_in))."""
    k = 1.0 / jnp.sqrt(jnp.float32(fan_in))
    wk, bk = jax.random.split(key)
    w = jax.random.uniform(wk, (fan_in, fan_out), jnp.float32, -k, k)  # (in, out)
    b = jax.random.uniform(bk, (1, fan_out), jnp.float32, -k, k)
    return w, b


def _bn_fold(dim, eps=1e-5):
    """BatchNorm1d eval-mode affine at default init (gamma=1, beta=0, mean=0, var=1)."""
    gamma = jnp.ones((1, dim), jnp.float32)
    beta = jnp.zeros((1, dim), jnp.float32)
    running_mean = jnp.zeros((1, dim), jnp.float32)
    running_var = jnp.ones((1, dim), jnp.float32)
    scale = gamma / jnp.sqrt(running_var + eps)
    shift = beta - running_mean * scale
    return scale, shift


def _round_up(x, m):
    return -(-x // m) * m


def make_fused_params(key, board_size, action_space, dim):
    """Build PyTorch-equivalent params with BN / bias / score-norm folded in."""
    input_size = board_size * board_size * 4 + 2
    k_pad = _round_up(input_size, 128)
    head_pad = _round_up(action_space + 1, 128)
    keys = jax.random.split(key, 8)

    # ---- Layer 1: fold BN and the 1/board_size^2 score normalization. ----
    w1, b1 = _linear_init(keys[0], input_size, dim)
    sc, sh = _bn_fold(dim)
    norm = jnp.ones((input_size, 1), jnp.float32)
    norm = norm.at[-2:].set(1.0 / float(board_size * board_size))  # score rows
    w1f = (w1 * norm) * sc
    b1f = b1 * sc + sh
    w1p = jnp.zeros((k_pad, dim), jnp.float32).at[:input_size].set(w1f)

    # ---- Layers 2..6: fold BN, stack into one array. ----
    ws, bs = [], []
    for l in range(1, 6):
        w, b = _linear_init(keys[l], dim, dim)
        sc, sh = _bn_fold(dim)
        ws.append(w * sc)
        bs.append(b * sc + sh)
    wh = jnp.stack(ws)   # (5, dim, dim)
    bh = jnp.stack(bs)   # (5, 1, dim)

    # ---- Merged policy + value head, padded to a lane-dense 128 columns. ----
    wp, bp = _linear_init(keys[6], dim, action_space)
    wv, bv = _linear_init(keys[7], dim, 1)
    wo = jnp.zeros((dim, head_pad), jnp.float32)
    wo = wo.at[:, :action_space].set(wp).at[:, action_space:action_space + 1].set(wv)
    bo = jnp.zeros((1, head_pad), jnp.float32)
    bo = bo.at[:, :action_space].set(bp).at[:, action_space:action_space + 1].set(bv)

    return {
        "w1": w1p.astype(jnp.bfloat16), "b1": b1f,
        "wh": wh.astype(jnp.bfloat16), "bh": bh,
        "wo": wo.astype(jnp.bfloat16), "bo": bo,
    }


# ----------------------------- Wrapper ---------------------------------------

def _pick_batch_tile(batch):
    """Large tiles to amortize per-step overhead; keep >=2 steps for v7x's 2 TCs."""
    if batch <= 128:
        return 128                      # pad tiny batches to one full tile
    tb = 512
    while tb > 128 and _round_up(batch, tb) // tb < 2:
        tb //= 2
    return tb


@functools.partial(jax.jit, static_argnames=("board_size", "action_space"))
def dnb_net_fc_forward(x, s, params, *, board_size, action_space):
    """x: (B, board_size, board_size, 4) float32; s: (B, 2) float32."""
    batch = x.shape[0]
    dim = params["wh"].shape[-1]
    k_pad = params["w1"].shape[0]
    head_pad = params["wo"].shape[-1]
    input_size = board_size * board_size * 4 + 2

    tb = _pick_batch_tile(batch)
    b_pad = _round_up(batch, tb)
    grid = (b_pad // tb,)

    # Fused input prep: concat -> bf16 cast -> single pad (score norm is
    # folded into w1, so no per-element scaling here).
    inp = jnp.concatenate([x.reshape(batch, -1), s], axis=1).astype(jnp.bfloat16)
    inp_p = jnp.pad(inp, ((0, b_pad - batch), (0, k_pad - input_size)))

    # Explicit VMEM budget: single-buffered weights + double-buffered bf16 I/O
    # blocks, plus headroom for f32 intermediates. Capped well under v7x's
    # 64 MiB physical VMEM.
    weight_bytes = (k_pad * dim + 5 * dim * dim + dim * head_pad) * 2
    bias_bytes = (dim + 5 * dim + head_pad) * 4
    io_bytes = 2 * tb * k_pad * 2 + 2 * tb * head_pad * 2
    vmem_limit = int(min(2 * (weight_bytes + bias_bytes + io_bytes) + (8 << 20),
                         48 << 20))

    # Grid-invariant weights/biases: VMEM-resident, single-buffered.
    def _resident(shape, index_map):
        return pl.BlockSpec(shape, index_map, pipeline_mode=pl.Buffered(1))

    out = pl.pallas_call(
        functools.partial(_dnb_fc_kernel, action_space=action_space),
        out_shape=jax.ShapeDtypeStruct((b_pad, head_pad), jnp.bfloat16),
        grid_spec=pltpu.PrefetchScalarGridSpec(
            num_scalar_prefetch=0,
            grid=grid,
            in_specs=[
                pl.BlockSpec((tb, k_pad), lambda i: (i, 0)),          # x block
                _resident((k_pad, dim), lambda i: (0, 0)),            # w1
                _resident((1, dim), lambda i: (0, 0)),                # b1
                _resident((5, dim, dim), lambda i: (0, 0, 0)),        # hidden W stack
                _resident((5, 1, dim), lambda i: (0, 0, 0)),          # hidden b stack
                _resident((dim, head_pad), lambda i: (0, 0)),         # merged head W
                _resident((1, head_pad), lambda i: (0, 0)),           # merged head b
            ],
            out_specs=pl.BlockSpec((tb, head_pad), lambda i: (i, 0)),
        ),
        compiler_params=pltpu.CompilerParams(
            dimension_semantics=("parallel",),
            vmem_limit_bytes=vmem_limit),
    )(inp_p, params["w1"], params["b1"], params["wh"], params["bh"],
      params["wo"], params["bo"])

    p = out[:batch, :action_space].astype(jnp.float32)
    v = out[:batch, action_space].astype(jnp.float32)   # (B,)
    if batch == 1:                                       # mimic torch .squeeze()
        v = jnp.squeeze(v)
    return p, v


# ----------------------------- Main -------------------------------------------

if __name__ == "__main__":
    board_size = 3
    action_space = 2 * board_size * (board_size + 1)  # 24 edges for a 3x3 board
    dim = 256                                          # module default hidden dim
    batch = 2

    key = jax.random.PRNGKey(0)
    pkey, xkey, skey = jax.random.split(key, 3)

    params = make_fused_params(pkey, board_size, action_space, dim)

    # Board states in {0, 1}, scores as small integers.
    x = jax.random.bernoulli(
        xkey, 0.5, (batch, board_size, board_size, 4)).astype(jnp.float32)
    s = jax.random.randint(
        skey, (batch, 2), 0, board_size * board_size).astype(jnp.float32)

    p, v = dnb_net_fc_forward(x, s, params,
                              board_size=board_size, action_space=action_space)
    jax.block_until_ready((p, v))

    assert p.shape == (batch, action_space)
    assert v.shape == (batch,)
    # log_softmax rows should sum to ~1 after exp (bf16 output -> loose tol).
    assert bool(jnp.all(jnp.abs(jnp.sum(jnp.exp(p), axis=1) - 1.0) < 2e-2))
    assert bool(jnp.all(jnp.abs(v) <= 1.0))

    print("KERNEL_OK")
</pallas_src>

<mosaic_0001>
module attributes {stable_mosaic.version = 11 : i64} {
  func.func @_dnb_fc_kernel(%arg0: i32, %arg1: memref<128x128xbf16, #tpu.memory_space<vmem>>, %arg2: memref<128x256xbf16, #tpu.memory_space<vmem>>, %arg3: memref<1x256xf32, #tpu.memory_space<vmem>>, %arg4: memref<5x256x256xbf16, #tpu.memory_space<vmem>>, %arg5: memref<5x1x256xf32, #tpu.memory_space<vmem>>, %arg6: memref<256x128xbf16, #tpu.memory_space<vmem>>, %arg7: memref<1x128xf32, #tpu.memory_space<vmem>>, %arg8: memref<128x128xbf16, #tpu.memory_space<vmem>>) attributes {dimension_semantics = [#tpu.dimension_semantics<parallel>], iteration_bounds = array<i64: 1>, scalar_prefetch = 0 : i64, scratch_operands = 0 : i64, tpu.core_type = #tpu.core_type<tc>, window_params = [{transform_indices = @transform_0, window_bounds = array<i64: 128, 128>}, {pipeline_mode = #tpu.pipeline_mode<synchronous>, transform_indices = @transform_1, window_bounds = array<i64: 128, 256>}, {pipeline_mode = #tpu.pipeline_mode<synchronous>, transform_indices = @transform_2, window_bounds = array<i64: 1, 256>}, {pipeline_mode = #tpu.pipeline_mode<synchronous>, transform_indices = @transform_3, window_bounds = array<i64: 5, 256, 256>}, {pipeline_mode = #tpu.pipeline_mode<synchronous>, transform_indices = @transform_4, window_bounds = array<i64: 5, 1, 256>}, {pipeline_mode = #tpu.pipeline_mode<synchronous>, transform_indices = @transform_5, window_bounds = array<i64: 256, 128>}, {pipeline_mode = #tpu.pipeline_mode<synchronous>, transform_indices = @transform_6, window_bounds = array<i64: 1, 128>}, {transform_indices = @transform_7, window_bounds = array<i64: 128, 128>}]} {
    %c0 = arith.constant 0 : index
    %c0_0 = arith.constant 0 : index
    %0 = vector.load %arg1[%c0, %c0_0] : memref<128x128xbf16, #tpu.memory_space<vmem>>, vector<128x128xbf16>
    %c0_1 = arith.constant 0 : index
    %c0_2 = arith.constant 0 : index
    %1 = vector.load %arg2[%c0_1, %c0_2] : memref<128x256xbf16, #tpu.memory_space<vmem>>, vector<128x256xbf16>
    %cst = arith.constant dense<0.000000e+00> : vector<128x256xf32>
    %2 = tpu.matmul %0, %1, %cst {dimension_numbers = #tpu.dot_dimension_numbers<[1], [0], [0], [1], [0, 0, 1, 1], [], []>} : vector<128x128xbf16>, vector<128x256xbf16>, vector<128x256xf32> -> vector<128x256xf32>
    %c0_3 = arith.constant 0 : index
    %c0_4 = arith.constant 0 : index
    %3 = vector.load %arg3[%c0_3, %c0_4] : memref<1x256xf32, #tpu.memory_space<vmem>>, vector<1x256xf32>
    %4 = vector.broadcast %3 : vector<1x256xf32> to vector<128x256xf32>
    %5 = arith.addf %2, %4 : vector<128x256xf32>
    %cst_5 = arith.constant 0.000000e+00 : f32
    %6 = vector.broadcast %cst_5 : f32 to vector<128x256xf32>
    %7 = arith.maximumf %5, %6 : vector<128x256xf32>
    %8 = arith.truncf %7 : vector<128x256xf32> to vector<128x256xbf16>
    %c0_6 = arith.constant 0 : index
    %c0_7 = arith.constant 0 : index
    %c0_8 = arith.constant 0 : index
    %9 = vector.load %arg4[%c0_6, %c0_7, %c0_8] : memref<5x256x256xbf16, #tpu.memory_space<vmem>>, vector<1x256x256xbf16>
    %10 = vector.shape_cast %9 : vector<1x256x256xbf16> to vector<256x256xbf16>
    %cst_9 = arith.constant dense<0.000000e+00> : vector<128x256xf32>
    %11 = tpu.matmul %8, %10, %cst_9 {dimension_numbers = #tpu.dot_dimension_numbers<[1], [0], [0], [1], [0, 0, 1, 1], [], []>} : vector<128x256xbf16>, vector<256x256xbf16>, vector<128x256xf32> -> vector<128x256xf32>
    %c0_10 = arith.constant 0 : index
    %c0_11 = arith.constant 0 : index
    %c0_12 = arith.constant 0 : index
    %12 = vector.load %arg5[%c0_10, %c0_11, %c0_12] : memref<5x1x256xf32, #tpu.memory_space<vmem>>, vector<1x1x256xf32>
    %13 = vector.shape_cast %12 : vector<1x1x256xf32> to vector<1x256xf32>
    %14 = vector.broadcast %13 : vector<1x256xf32> to vector<128x256xf32>
    %15 = arith.addf %11, %14 : vector<128x256xf32>
    %cst_13 = arith.constant 0.000000e+00 : f32
    %16 = vector.broadcast %cst_13 : f32 to vector<128x256xf32>
    %17 = arith.maximumf %15, %16 : vector<128x256xf32>
    %18 = arith.truncf %17 : vector<128x256xf32> to vector<128x256xbf16>
    %c1 = arith.constant 1 : index
    %c0_14 = arith.constant 0 : index
    %c0_15 = arith.constant 0 : index
    %19 = vector.load %arg4[%c1, %c0_14, %c0_15] : memref<5x256x256xbf16, #tpu.memory_space<vmem>>, vector<1x256x256xbf16>
    %20 = vector.shape_cast %19 : vector<1x256x256xbf16> to vector<256x256xbf16>
    %cst_16 = arith.constant dense<0.000000e+00> : vector<128x256xf32>
    %21 = tpu.matmul %18, %20, %cst_16 {dimension_numbers = #tpu.dot_dimension_numbers<[1], [0], [0], [1], [0, 0, 1, 1], [], []>} : vector<128x256xbf16>, vector<256x256xbf16>, vector<128x256xf32> -> vector<128x256xf32>
    %c1_17 = arith.constant 1 : index
    %c0_18 = arith.constant 0 : index
    %c0_19 = arith.constant 0 : index
    %22 = vector.load %arg5[%c1_17, %c0_18, %c0_19] : memref<5x1x256xf32, #tpu.memory_space<vmem>>, vector<1x1x256xf32>
    %23 = vector.shape_cast %22 : vector<1x1x256xf32> to vector<1x256xf32>
    %24 = vector.broadcast %23 : vector<1x256xf32> to vector<128x256xf32>
    %25 = arith.addf %21, %24 : vector<128x256xf32>
    %cst_20 = arith.constant 0.000000e+00 : f32
    %26 = vector.broadcast %cst_20 : f32 to vector<128x256xf32>
    %27 = arith.maximumf %25, %26 : vector<128x256xf32>
    %28 = arith.truncf %27 : vector<128x256xf32> to vector<128x256xbf16>
    %c2 = arith.constant 2 : index
    %c0_21 = arith.constant 0 : index
    %c0_22 = arith.constant 0 : index
    %29 = vector.load %arg4[%c2, %c0_21, %c0_22] : memref<5x256x256xbf16, #tpu.memory_space<vmem>>, vector<1x256x256xbf16>
    %30 = vector.shape_cast %29 : vector<1x256x256xbf16> to vector<256x256xbf16>
    %cst_23 = arith.constant dense<0.000000e+00> : vector<128x256xf32>
    %31 = tpu.matmul %28, %30, %cst_23 {dimension_numbers = #tpu.dot_dimension_numbers<[1], [0], [0], [1], [0, 0, 1, 1], [], []>} : vector<128x256xbf16>, vector<256x256xbf16>, vector<128x256xf32> -> vector<128x256xf32>
    %c2_24 = arith.constant 2 : index
    %c0_25 = arith.constant 0 : index
    %c0_26 = arith.constant 0 : index
    %32 = vector.load %arg5[%c2_24, %c0_25, %c0_26] : memref<5x1x256xf32, #tpu.memory_space<vmem>>, vector<1x1x256xf32>
    %33 = vector.shape_cast %32 : vector<1x1x256xf32> to vector<1x256xf32>
    %34 = vector.broadcast %33 : vector<1x256xf32> to vector<128x256xf32>
    %35 = arith.addf %31, %34 : vector<128x256xf32>
    %cst_27 = arith.constant 0.000000e+00 : f32
    %36 = vector.broadcast %cst_27 : f32 to vector<128x256xf32>
    %37 = arith.maximumf %35, %36 : vector<128x256xf32>
    %38 = arith.truncf %37 : vector<128x256xf32> to vector<128x256xbf16>
    %c3 = arith.constant 3 : index
    %c0_28 = arith.constant 0 : index
    %c0_29 = arith.constant 0 : index
    %39 = vector.load %arg4[%c3, %c0_28, %c0_29] : memref<5x256x256xbf16, #tpu.memory_space<vmem>>, vector<1x256x256xbf16>
    %40 = vector.shape_cast %39 : vector<1x256x256xbf16> to vector<256x256xbf16>
    %cst_30 = arith.constant dense<0.000000e+00> : vector<128x256xf32>
    %41 = tpu.matmul %38, %40, %cst_30 {dimension_numbers = #tpu.dot_dimension_numbers<[1], [0], [0], [1], [0, 0, 1, 1], [], []>} : vector<128x256xbf16>, vector<256x256xbf16>, vector<128x256xf32> -> vector<128x256xf32>
    %c3_31 = arith.constant 3 : index
    %c0_32 = arith.constant 0 : index
    %c0_33 = arith.constant 0 : index
    %42 = vector.load %arg5[%c3_31, %c0_32, %c0_33] : memref<5x1x256xf32, #tpu.memory_space<vmem>>, vector<1x1x256xf32>
    %43 = vector.shape_cast %42 : vector<1x1x256xf32> to vector<1x256xf32>
    %44 = vector.broadcast %43 : vector<1x256xf32> to vector<128x256xf32>
    %45 = arith.addf %41, %44 : vector<128x256xf32>
    %cst_34 = arith.constant 0.000000e+00 : f32
    %46 = vector.broadcast %cst_34 : f32 to vector<128x256xf32>
    %47 = arith.maximumf %45, %46 : vector<128x256xf32>
    %48 = arith.truncf %47 : vector<128x256xf32> to vector<128x256xbf16>
    %c4 = arith.constant 4 : index
    %c0_35 = arith.constant 0 : index
    %c0_36 = arith.constant 0 : index
    %49 = vector.load %arg4[%c4, %c0_35, %c0_36] : memref<5x256x256xbf16, #tpu.memory_space<vmem>>, vector<1x256x256xbf16>
    %50 = vector.shape_cast %49 : vector<1x256x256xbf16> to vector<256x256xbf16>
    %cst_37 = arith.constant dense<0.000000e+00> : vector<128x256xf32>
    %51 = tpu.matmul %48, %50, %cst_37 {dimension_numbers = #tpu.dot_dimension_numbers<[1], [0], [0], [1], [0, 0, 1, 1], [], []>} : vector<128x256xbf16>, vector<256x256xbf16>, vector<128x256xf32> -> vector<128x256xf32>
    %c4_38 = arith.constant 4 : index
    %c0_39 = arith.constant 0 : index
    %c0_40 = arith.constant 0 : index
    %52 = vector.load %arg5[%c4_38, %c0_39, %c0_40] : memref<5x1x256xf32, #tpu.memory_space<vmem>>, vector<1x1x256xf32>
    %53 = vector.shape_cast %52 : vector<1x1x256xf32> to vector<1x256xf32>
    %54 = vector.broadcast %53 : vector<1x256xf32> to vector<128x256xf32>
    %55 = arith.addf %51, %54 : vector<128x256xf32>
    %cst_41 = arith.constant 0.000000e+00 : f32
    %56 = vector.broadcast %cst_41 : f32 to vector<128x256xf32>
    %57 = arith.maximumf %55, %56 : vector<128x256xf32>
    %58 = arith.truncf %57 : vector<128x256xf32> to vector<128x256xbf16>
    %c0_42 = arith.constant 0 : index
    %c0_43 = arith.constant 0 : index
    %59 = vector.load %arg6[%c0_42, %c0_43] : memref<256x128xbf16, #tpu.memory_space<vmem>>, vector<256x128xbf16>
    %cst_44 = arith.constant dense<0.000000e+00> : vector<128x128xf32>
    %60 = tpu.matmul %58, %59, %cst_44 {dimension_numbers = #tpu.dot_dimension_numbers<[1], [0], [0], [1], [0, 0, 1, 1], [], []>} : vector<128x256xbf16>, vector<256x128xbf16>, vector<128x128xf32> -> vector<128x128xf32>
    %c0_45 = arith.constant 0 : index
    %c0_46 = arith.constant 0 : index
    %61 = vector.load %arg7[%c0_45, %c0_46] : memref<1x128xf32, #tpu.memory_space<vmem>>, vector<1x128xf32>
    %62 = vector.broadcast %61 : vector<1x128xf32> to vector<128x128xf32>
    %63 = arith.addf %60, %62 : vector<128x128xf32>
    %64 = tpu.iota {dimensions = array<i32: 1>} : vector<128x128xi32>
    %c24_i32 = arith.constant 24 : i32
    %65 = vector.broadcast %c24_i32 : i32 to vector<128x128xi32>
    %66 = arith.cmpi slt, %64, %65 : vector<128x128xi32>
    %cst_47 = arith.constant 0xFF800000 : f32
    %67 = vector.broadcast %cst_47 : f32 to vector<128x128xf32>
    %68 = arith.select %66, %63, %67 : vector<128x128xi1>, vector<128x128xf32>
    %cst_48 = arith.constant dense<0xFF800000> : vector<128xf32>
    %69 = vector.multi_reduction <maximumf>, %68, %cst_48 [1] : vector<128x128xf32> to vector<128xf32>
    %70 = vector.shape_cast %69 : vector<128xf32> to vector<128x1xf32>
    %71 = vector.broadcast %70 : vector<128x1xf32> to vector<128x128xf32>
    %72 = arith.subf %63, %71 : vector<128x128xf32>
    %73 = math.exp %72 : vector<128x128xf32>
    %cst_49 = arith.constant 0.000000e+00 : f32
    %74 = vector.broadcast %cst_49 : f32 to vector<128x128xf32>
    %75 = arith.select %66, %73, %74 : vector<128x128xi1>, vector<128x128xf32>
    %cst_50 = arith.constant dense<0.000000e+00> : vector<128xf32>
    %76 = vector.multi_reduction <add>, %75, %cst_50 [1] : vector<128x128xf32> to vector<128xf32>
    %77 = vector.shape_cast %76 : vector<128xf32> to vector<128x1xf32>
    %78 = math.log %77 : vector<128x1xf32>
    %79 = vector.broadcast %78 : vector<128x1xf32> to vector<128x128xf32>
    %80 = arith.subf %72, %79 : vector<128x128xf32>
    %81 = vector.extract_strided_slice %63 {offsets = [0, 24], sizes = [128, 1], strides = [1, 1]} : vector<128x128xf32> to vector<128x1xf32>
    %82 = math.tanh %81 : vector<128x1xf32>
    %c24_i32_51 = arith.constant 24 : i32
    %83 = vector.broadcast %c24_i32_51 : i32 to vector<128x128xi32>
    %84 = arith.cmpi eq, %64, %83 : vector<128x128xi32>
    %cst_52 = arith.constant 0.000000e+00 : f32
    %85 = vector.shape_cast %82 : vector<128x1xf32> to vector<128x1xf32>
    %86 = vector.broadcast %85 : vector<128x1xf32> to vector<128x128xf32>
    %87 = vector.broadcast %cst_52 : f32 to vector<128x128xf32>
    %88 = arith.select %84, %86, %87 : vector<128x128xi1>, vector<128x128xf32>
    %89 = arith.select %66, %80, %88 : vector<128x128xi1>, vector<128x128xf32>
    %90 = arith.truncf %89 : vector<128x128xf32> to vector<128x128xbf16>
    %c0_53 = arith.constant 0 : index
    %c0_54 = arith.constant 0 : index
    %91 = vector.load %arg8[%c0_53, %c0_54] : memref<128x128xbf16, #tpu.memory_space<vmem>>, vector<128x128xbf16>
    tpu.vector_store %arg8[%c0_53, %c0_54], %90 {strides = array<i32>} : memref<128x128xbf16, #tpu.memory_space<vmem>>, vector<128x128xbf16>,
    return
  }
  func.func @transform_0(%arg0: i32) -> (i32, i32) {
    %c0_i32 = arith.constant 0 : i32
    %c0_i32_0 = arith.constant 0 : i32
    return %arg0, %c0_i32 : i32, i32
  }
  func.func @transform_1(%arg0: i32) -> (i32, i32) {
    %c0_i32 = arith.constant 0 : i32
    %c0_i32_0 = arith.constant 0 : i32
    %c0_i32_1 = arith.constant 0 : i32
    return %c0_i32, %c0_i32_0 : i32, i32
  }
  func.func @transform_2(%arg0: i32) -> (i32, i32) {
    %c0_i32 = arith.constant 0 : i32
    %c0_i32_0 = arith.constant 0 : i32
    %c0_i32_1 = arith.constant 0 : i32
    return %c0_i32, %c0_i32_0 : i32, i32
  }
  func.func @transform_3(%arg0: i32) -> (i32, i32, i32) {
    %c0_i32 = arith.constant 0 : i32
    %c0_i32_0 = arith.constant 0 : i32
    %c0_i32_1 = arith.constant 0 : i32
    %c0_i32_2 = arith.constant 0 : i32
    return %c0_i32, %c0_i32_0, %c0_i32_1 : i32, i32, i32
  }
  func.func @transform_4(%arg0: i32) -> (i32, i32, i32) {
    %c0_i32 = arith.constant 0 : i32
    %c0_i32_0 = arith.constant 0 : i32
    %c0_i32_1 = arith.constant 0 : i32
    %c0_i32_2 = arith.constant 0 : i32
    return %c0_i32, %c0_i32_0, %c0_i32_1 : i32, i32, i32
  }
  func.func @transform_5(%arg0: i32) -> (i32, i32) {
    %c0_i32 = arith.constant 0 : i32
    %c0_i32_0 = arith.constant 0 : i32
    %c0_i32_1 = arith.constant 0 : i32
    return %c0_i32, %c0_i32_0 : i32, i32
  }
  func.func @transform_6(%arg0: i32) -> (i32, i32) {
    %c0_i32 = arith.constant 0 : i32
    %c0_i32_0 = arith.constant 0 : i32
    %c0_i32_1 = arith.constant 0 : i32
    return %c0_i32, %c0_i32_0 : i32, i32
  }
  func.func @transform_7(%arg0: i32) -> (i32, i32) {
    %c0_i32 = arith.constant 0 : i32
    %c0_i32_0 = arith.constant 0 : i32
    return %arg0, %c0_i32 : i32, i32
  }
}

</mosaic_0001>

<llo_original>
// kernel: dnb_net_fc_forward.1
$region0: #{dnb_net_fc_forward.1}
  #allocation0 [shape = 'u32[]', space=smem, size = 0x4, offset = 0x4, fixed_abs, tag = 'smem constant byte address 0x4 - core index']
  #allocation1 [shape = 'u32[144,128]{1,0:T(1,128)}', space=vmem, size = 0x12000, scoped, tag = 'internal scratch']
  %s0 = inlined_call_operand.vmem [shape: bf16[128,128], index: 0, kind: input, shape index: {}]
  %s1 = inlined_call_operand.vmem [shape: bf16[128,256], index: 1, kind: input, shape index: {}]
  %s2 = inlined_call_operand.vmem [shape: f32[1,256], index: 2, kind: input, shape index: {}]
  %s3 = inlined_call_operand.hbm [shape: bf16[5,256,256], index: 3, kind: input, shape index: {}]
  %s4 = inlined_call_operand.vmem [shape: f32[5,1,256], index: 4, kind: input, shape index: {}]
  %s5 = inlined_call_operand.hbm [shape: bf16[256,128], index: 5, kind: input, shape index: {}]
  %s6 = inlined_call_operand.vmem [shape: f32[1,128], index: 6, kind: input, shape index: {}]
  %s7 = inlined_call_operand.vmem [shape: bf16[128,128], index: 7, kind: output, shape index: {}]
  %s8 = sld [smem:[#allocation0]]
  $region46: #{dnb_net_fc_forward.1} parent=0
    _
  %s10 = ssub.s32 1, %s8
  %s11 = scalar_select 0, %s10, %s8
  $region1: #{dnb_net_fc_forward.1} parent=0
    #allocation2 [shape = 'u8[655360]{0}', space=vmem, size = 0xa0000, scoped, tag = 'input window, operand 3, single buffered']
    #allocation3 [shape = 's32[1]{0}', space=sflag, size = 0x4, scoped, tag = 'scoped memory for dnb_net_fc_forward.1']
    #allocation4 [shape = 'u8[65536]{0}', space=vmem, size = 0x10000, scoped, tag = 'input window, operand 5, single buffered']
    #allocation5 [shape = 's32[1]{0}', space=sflag, size = 0x4, scoped, tag = 'scoped memory for dnb_net_fc_forward.1']
    %12 = vsyncpa [#allocation3], 0
    %13 = vsyncpa [#allocation5], 0
    // Predicated region
    $region2: #{dnb_net_fc_forward.1} parent=1 // pred_check
      _
    $region3: #{dnb_net_fc_forward.1} parent=1 // pred_check_branch
      %15 = sbr.rel (0) target = $region5
    $region4: #{dnb_net_fc_forward.1} parent=1 // pred_region
      _
    $region5: #{dnb_net_fc_forward.1} parent=1 // pred_fallthru
      _
    // Predicated region
    $region6: #{dnb_net_fc_forward.1} parent=1 // pred_check
      _
    $region7: #{dnb_net_fc_forward.1} parent=1 // pred_check_branch
      %17 = sbr.rel (0) target = $region9
    $region8: #{dnb_net_fc_forward.1} parent=1 // pred_region
      _
    $region9: #{dnb_net_fc_forward.1} parent=1 // pred_fallthru
      _
    // Predicated region
    $region10: #{dnb_net_fc_forward.1} parent=1 // pred_check
      _
    $region11: #{dnb_net_fc_forward.1} parent=1 // pred_check_branch
      %19 = sbr.rel (0) target = $region13
    $region12: #{dnb_net_fc_forward.1} parent=1 // pred_region
      _
    $region13: #{dnb_net_fc_forward.1} parent=1 // pred_fallthru
      _
    // Predicated region
    $region14: #{dnb_net_fc_forward.1} parent=1 // pred_check
      _
    $region15: #{dnb_net_fc_forward.1} parent=1 // pred_check_branch
      %21 = sbr.rel (0) target = $region17
    $region16: #{dnb_net_fc_forward.1} parent=1 // pred_region
      %s23 = ssub.s32 20480, 20480
      %24 = vsyncadd [#allocation3], %s23
      %s25 = sshll.u32 [#allocation2], 4
      %s26 = int_to_ptr.vmem [resolvable:$true] %s25
      %31 = dma.hbm_to_vmem [thread:$0]  %s3, 20480, %s26, [#allocation3], 128, 128, 8
    $region17: #{dnb_net_fc_forward.1} parent=1 // pred_fallthru
      _
    // Predicated region
    $region18: #{dnb_net_fc_forward.1} parent=1 // pred_check
      _
    $region19: #{dnb_net_fc_forward.1} parent=1 // pred_check_branch
      %33 = sbr.rel (0) target = $region21
    $region20: #{dnb_net_fc_forward.1} parent=1 // pred_region
      _
    $region21: #{dnb_net_fc_forward.1} parent=1 // pred_fallthru
      _
    // Predicated region
    $region22: #{dnb_net_fc_forward.1} parent=1 // pred_check
      _
    $region23: #{dnb_net_fc_forward.1} parent=1 // pred_check_branch
      %35 = sbr.rel (0) target = $region25
    $region24: #{dnb_net_fc_forward.1} parent=1 // pred_region
      %s37 = ssub.s32 2048, 2048
      %38 = vsyncadd [#allocation5], %s37
      %s39 = sshll.u32 [#allocation4], 4
      %s40 = int_to_ptr.vmem [resolvable:$true] %s39
      %45 = dma.hbm_to_vmem [thread:$0]  %s5, 2048, %s40, [#allocation5], 64, 64, 4
    $region25: #{dnb_net_fc_forward.1} parent=1 // pred_fallthru
      _
    // Predicated region
    $region26: #{dnb_net_fc_forward.1} parent=1 // pred_check
      _
    $region27: #{dnb_net_fc_forward.1} parent=1 // pred_check_branch
      %47 = sbr.rel (0) target = $region29
    $region28: #{dnb_net_fc_forward.1} parent=1 // pred_region
      _
    $region29: #{dnb_net_fc_forward.1} parent=1 // pred_fallthru
      _
    // Predicated region
    $region30: #{dnb_net_fc_forward.1} parent=1 // pred_check
      _
    $region31: #{dnb_net_fc_forward.1} parent=1 // pred_check_branch
      %49 = sbr.rel (0) target = $region33
    $region32: #{dnb_net_fc_forward.1} parent=1 // pred_region
      %50 = dma.done [#allocation3], 20480
    $region33: #{dnb_net_fc_forward.1} parent=1 // pred_fallthru
      _
    // Predicated region
    $region34: #{dnb_net_fc_forward.1} parent=1 // pred_check
      _
    $region35: #{dnb_net_fc_forward.1} parent=1 // pred_check_branch
      %52 = sbr.rel (0) target = $region37
    $region36: #{dnb_net_fc_forward.1} parent=1 // pred_region
      %53 = dma.done [#allocation5], 2048
    $region37: #{dnb_net_fc_forward.1} parent=1 // pred_fallthru
      _
    %v55 = vld [vmem:[%s0] sm:$0xf]
    %v56 = vld [vmem:[%s0 + $0x4] sm:$0xf]
    %v57 = vld [vmem:[%s0 + $0x8] sm:$0xf]
    %v58 = vld [vmem:[%s0 + $0xc] sm:$0xf]
    %v59 = vld [vmem:[%s0 + $0x10] sm:$0xf]
    %v60 = vld [vmem:[%s0 + $0x14] sm:$0xf]
    %v61 = vld [vmem:[%s0 + $0x18] sm:$0xf]
    %v62 = vld [vmem:[%s0 + $0x1c] sm:$0xf]
    %v63 = vld [vmem:[%s0 + $0x20] sm:$0xf]
    %v64 = vld [vmem:[%s0 + $0x24] sm:$0xf]
    %v65 = vld [vmem:[%s0 + $0x28] sm:$0xf]
    %v66 = vld [vmem:[%s0 + $0x2c] sm:$0xf]
    %v67 = vld [vmem:[%s0 + $0x30] sm:$0xf]
    %v68 = vld [vmem:[%s0 + $0x34] sm:$0xf]
    %v69 = vld [vmem:[%s0 + $0x38] sm:$0xf]
    %v70 = vld [vmem:[%s0 + $0x3c] sm:$0xf]
    %v71 = vld [vmem:[%s1] sm:$0xff]
    %v72 = vld [vmem:[%s1 + $0x8] sm:$0xff]
    %v73 = vld [vmem:[%s1 + $0x10] sm:$0xff]
    %v74 = vld [vmem:[%s1 + $0x18] sm:$0xff]
    %v75 = vld [vmem:[%s1 + $0x20] sm:$0xff]
    %v76 = vld [vmem:[%s1 + $0x28] sm:$0xff]
    %v77 = vld [vmem:[%s1 + $0x30] sm:$0xff]
    %v78 = vld [vmem:[%s1 + $0x38] sm:$0xff]
    %v79 = vld [vmem:[%s1 + $0x40] sm:$0xff]
    %v80 = vld [vmem:[%s1 + $0x48] sm:$0xff]
    %v81 = vld [vmem:[%s1 + $0x50] sm:$0xff]
    %v82 = vld [vmem:[%s1 + $0x58] sm:$0xff]
    %v83 = vld [vmem:[%s1 + $0x60] sm:$0xff]
    %v84 = vld [vmem:[%s1 + $0x68] sm:$0xff]
    %v85 = vld [vmem:[%s1 + $0x70] sm:$0xff]
    %v86 = vld [vmem:[%s1 + $0x78] sm:$0xff]
    %v87 = vld [vmem:[%s2] sm:$0x3]
    %v89 = vlaneseq
    %v90 = vshrl.u32 %v89, 7
    %v91 = vsub.s32 0, %v90
    %v92 = vrot.slane %v87, %v91
    %v93 = vlaneseq
    %v94 = vshrl.u32 %v93, 7
    %v95 = vsub.s32 1, %v94
    %v96 = vrot.slane %v87, %v95
    %v115 = vunpack.c.l.b16 %v55
    %v116 = vunpack.c.l.b16 %v56
    %v117 = vunpack.c.l.b16 %v57
    %v118 = vunpack.c.l.b16 %v58
    %v119 = vunpack.c.l.b16 %v59
    %v120 = vunpack.c.l.b16 %v60
    %v121 = vunpack.c.l.b16 %v61
    %v122 = vunpack.c.l.b16 %v62
    %v123 = vunpack.c.l.b16 %v63
    %v124 = vunpack.c.l.b16 %v64
    %v125 = vunpack.c.l.b16 %v65
    %v126 = vunpack.c.l.b16 %v66
    %v127 = vunpack.c.l.b16 %v67
    %v128 = vunpack.c.l.b16 %v68
    %v129 = vunpack.c.l.b16 %v69
    %v130 = vunpack.c.l.b16 %v70
    %v131 = vpack.c.b16 %v116, %v115
    %v132 = vpack.c.b16 %v118, %v117
    %v133 = vpack.c.b16 %v120, %v119
    %v134 = vpack.c.b16 %v122, %v121
    %v135 = vpack.c.b16 %v124, %v123
    %v136 = vpack.c.b16 %v126, %v125
    %v137 = vpack.c.b16 %v128, %v127
    %v138 = vpack.c.b16 %v130, %v129
    %v163 = vunpack.c.l.b16 %v71
    %v164 = vunpack.c.h.b16 %v71
    %v165 = vunpack.c.l.b16 %v72
    %v166 = vunpack.c.h.b16 %v72
    %v167 = vunpack.c.l.b16 %v73
    %v168 = vunpack.c.h.b16 %v73
    %v169 = vunpack.c.l.b16 %v74
    %v170 = vunpack.c.h.b16 %v74
    %v171 = vunpack.c.l.b16 %v75
    %v172 = vunpack.c.h.b16 %v75
    %v173 = vunpack.c.l.b16 %v76
    %v174 = vunpack.c.h.b16 %v76
    %v175 = vunpack.c.l.b16 %v77
    %v176 = vunpack.c.h.b16 %v77
    %v177 = vunpack.c.l.b16 %v78
    %v178 = vunpack.c.h.b16 %v78
    %v179 = vunpack.c.l.b16 %v79
    %v180 = vunpack.c.h.b16 %v79
    %v181 = vunpack.c.l.b16 %v80
    %v182 = vunpack.c.h.b16 %v80
    %v183 = vunpack.c.l.b16 %v81
    %v184 = vunpack.c.h.b16 %v81
    %v185 = vunpack.c.l.b16 %v82
    %v186 = vunpack.c.h.b16 %v82
    %v187 = vunpack.c.l.b16 %v83
    %v188 = vunpack.c.h.b16 %v83
    %v189 = vunpack.c.l.b16 %v84
    %v190 = vunpack.c.h.b16 %v84
    %v191 = vunpack.c.l.b16 %v85
    %v192 = vunpack.c.h.b16 %v85
    %v193 = vunpack.c.l.b16 %v86
    %v194 = vunpack.c.h.b16 %v86
    %v195 = vpack.c.b16 %v165, %v163
    %v196 = vpack.c.b16 %v166, %v164
    %v197 = vpack.c.b16 %v169, %v167
    %v198 = vpack.c.b16 %v170, %v168
    %v199 = vpack.c.b16 %v173, %v171
    %v200 = vpack.c.b16 %v174, %v172
    %v201 = vpack.c.b16 %v177, %v175
    %v202 = vpack.c.b16 %v178, %v176
    %v203 = vpack.c.b16 %v181, %v179
    %v204 = vpack.c.b16 %v182, %v180
    %v205 = vpack.c.b16 %v185, %v183
    %v206 = vpack.c.b16 %v186, %v184
    %v207 = vpack.c.b16 %v189, %v187
    %v208 = vpack.c.b16 %v190, %v188
    %v209 = vpack.c.b16 %v193, %v191
    %v210 = vpack.c.b16 %v194, %v192
    %227 = vmatprep.subr.bf16.mxu0 %v196
    %228 = vmatpush1.bf16.msra.mxu0 %v195
    %229 = vmatprep.subr.bf16.mxu0 %v198
    %230 = vmatpush1.bf16.msra.mxu0 %v197
    %231 = vmatprep.subr.bf16.mxu0 %v200
    %232 = vmatpush1.bf16.msra.mxu0 %v199
    %233 = vmatprep.subr.bf16.mxu0 %v202
    %234 = vmatpush1.bf16.msra.mxu0 %v201
    %235 = vmatprep.subr.bf16.mxu0 %v204
    %236 = vmatpush1.bf16.msra.mxu0 %v203
    %237 = vmatprep.subr.bf16.mxu0 %v206
    %238 = vmatpush1.bf16.msra.mxu0 %v205
    %239 = vmatprep.subr.bf16.mxu0 %v208
    %240 = vmatpush1.bf16.msra.mxu0 %v207
    %241 = vmatprep.subr.bf16.mxu0 %v210
    %242 = vmatpush1.bf16.msra.mxu0 %v209
    %243 = vmatprep.subr.bf16.mxu0 0
    %244 = vmatpush1.bf16.msra.mxu0 0
    %245 = vmatprep.subr.bf16.mxu0 0
    %246 = vmatpush1.bf16.msra.mxu0 0
    %247 = vmatprep.subr.bf16.mxu0 0
    %248 = vmatpush1.bf16.msra.mxu0 0
    %249 = vmatprep.subr.bf16.mxu0 0
    %250 = vmatpush1.bf16.msra.mxu0 0
    %251 = vmatprep.subr.bf16.mxu0 0
    %252 = vmatpush1.bf16.msra.mxu0 0
    %253 = vmatprep.subr.bf16.mxu0 0
    %254 = vmatpush1.bf16.msra.mxu0 0
    %255 = vmatprep.subr.bf16.mxu0 0
    %256 = vmatpush1.bf16.msra.mxu0 0
    %257 = vmatprep.subr.bf16.mxu0 0
    %258 = vmatpush1.bf16.msra.mxu0 0
    %259 = vmatprep.mubr.bf16.mxu0 0
    %260 = vmatmul.mubr.bf16.gmra.mrb[0].mxu0 %v131
    %v261 = vpop.f32.mrb[0].mxu0
    %v262 = vadd.f32 %v92, %v261
    %v263 = vpop.f32.mrb[0].mxu0
    %v264 = vadd.f32 %v96, %v263
    %v265 = vpop.f32.mrb[0].mxu0
    %v266 = vadd.f32 %v92, %v265
    %v267 = vpop.f32.mrb[0].mxu0
    %v268 = vadd.f32 %v96, %v267
    %269 = vmatprep.mubr.bf16.mxu0 0
    %270 = vmatmul.mubr.bf16.gmra.mrb[0].mxu0 %v132
    %v271 = vpop.f32.mrb[0].mxu0
    %v272 = vadd.f32 %v92, %v271
    %v273 = vpop.f32.mrb[0].mxu0
    %v274 = vadd.f32 %v96, %v273
    %v275 = vpop.f32.mrb[0].mxu0
    %v276 = vadd.f32 %v92, %v275
    %v277 = vpop.f32.mrb[0].mxu0
    %v278 = vadd.f32 %v96, %v277
    %279 = vmatprep.mubr.bf16.mxu0 0
    %280 = vmatmul.mubr.bf16.gmra.mrb[0].mxu0 %v133
    %v281 = vpop.f32.mrb[0].mxu0
    %v282 = vadd.f32 %v92, %v281
    %v283 = vpop.f32.mrb[0].mxu0
    %v284 = vadd.f32 %v96, %v283
    %v285 = vpop.f32.mrb[0].mxu0
    %v286 = vadd.f32 %v92, %v285
    %v287 = vpop.f32.mrb[0].mxu0
    %v288 = vadd.f32 %v96, %v287
    %289 = vmatprep.mubr.bf16.mxu0 0
    %290 = vmatmul.mubr.bf16.gmra.mrb[0].mxu0 %v134
    %v291 = vpop.f32.mrb[0].mxu0
    %v292 = vadd.f32 %v92, %v291
    %v293 = vpop.f32.mrb[0].mxu0
    %v294 = vadd.f32 %v96, %v293
    %v295 = vpop.f32.mrb[0].mxu0
    %v296 = vadd.f32 %v92, %v295
    %v297 = vpop.f32.mrb[0].mxu0
    %v298 = vadd.f32 %v96, %v297
    %299 = vmatprep.mubr.bf16.mxu0 0
    %300 = vmatmul.mubr.bf16.gmra.mrb[0].mxu0 %v135
    %v301 = vpop.f32.mrb[0].mxu0
    %v302 = vadd.f32 %v92, %v301
    %v303 = vpop.f32.mrb[0].mxu0
    %v304 = vadd.f32 %v96, %v303
    %v305 = vpop.f32.mrb[0].mxu0
    %v306 = vadd.f32 %v92, %v305
    %v307 = vpop.f32.mrb[0].mxu0
    %v308 = vadd.f32 %v96, %v307
    %309 = vmatprep.mubr.bf16.mxu0 0
    %310 = vmatmul.mubr.bf16.gmra.mrb[0].mxu0 %v136
    %v311 = vpop.f32.mrb[0].mxu0
    %v312 = vadd.f32 %v92, %v311
    %v313 = vpop.f32.mrb[0].mxu0
    %v314 = vadd.f32 %v96, %v313
    %v315 = vpop.f32.mrb[0].mxu0
    %v316 = vadd.f32 %v92, %v315
    %v317 = vpop.f32.mrb[0].mxu0
    %v318 = vadd.f32 %v96, %v317
    %319 = vmatprep.mubr.bf16.mxu0 0
    %320 = vmatmul.mubr.bf16.gmra.mrb[0].mxu0 %v137
    %v321 = vpop.f32.mrb[0].mxu0
    %v322 = vadd.f32 %v92, %v321
    %v323 = vpop.f32.mrb[0].mxu0
    %v324 = vadd.f32 %v96, %v323
    %v325 = vpop.f32.mrb[0].mxu0
    %v326 = vadd.f32 %v92, %v325
    %v327 = vpop.f32.mrb[0].mxu0
    %v328 = vadd.f32 %v96, %v327
    %329 = vmatprep.mubr.bf16.mxu0 0
    %330 = vmatmul.mubr.bf16.gmra.mrb[0].mxu0 %v138
    %v331 = vpop.f32.mrb[0].mxu0
    %v332 = vadd.f32 %v92, %v331
    %v333 = vpop.f32.mrb[0].mxu0
    %v334 = vadd.f32 %v96, %v333
    %v335 = vpop.f32.mrb[0].mxu0
    %v336 = vadd.f32 %v92, %v335
    %v337 = vpop.f32.mrb[0].mxu0
    %v338 = vadd.f32 %v96, %v337
    %339 = vdwg.mxu0
    %v340 = vmax.f32 %v262, 0.0
    %v341 = vmax.f32 %v264, 0.0
    %v342 = vmax.f32 %v266, 0.0
    %v343 = vmax.f32 %v268, 0.0
    %v344 = vmax.f32 %v272, 0.0
    %v345 = vmax.f32 %v274, 0.0
    %v346 = vmax.f32 %v276, 0.0
    %v347 = vmax.f32 %v278, 0.0
    %v348 = vmax.f32 %v282, 0.0
    %v349 = vmax.f32 %v284, 0.0
    %v350 = vmax.f32 %v286, 0.0
    %v351 = vmax.f32 %v288, 0.0
    %v352 = vmax.f32 %v292, 0.0
    %v353 = vmax.f32 %v294, 0.0
    %v354 = vmax.f32 %v296, 0.0
    %v355 = vmax.f32 %v298, 0.0
    %v356 = vmax.f32 %v302, 0.0
    %v357 = vmax.f32 %v304, 0.0
    %v358 = vmax.f32 %v306, 0.0
    %v359 = vmax.f32 %v308, 0.0
    %v360 = vmax.f32 %v312, 0.0
    %v361 = vmax.f32 %v314, 0.0
    %v362 = vmax.f32 %v316, 0.0
    %v363 = vmax.f32 %v318, 0.0
    %v364 = vmax.f32 %v322, 0.0
    %v365 = vmax.f32 %v324, 0.0
    %v366 = vmax.f32 %v326, 0.0
    %v367 = vmax.f32 %v328, 0.0
    %v368 = vmax.f32 %v332, 0.0
    %v369 = vmax.f32 %v334, 0.0
    %v370 = vmax.f32 %v336, 0.0
    %v371 = vmax.f32 %v338, 0.0
    %v372 = vpack.c.bf16 %v342, %v340
    %v373 = vpack.c.bf16 %v343, %v341
    %v374 = vpack.c.bf16 %v346, %v344
    %v375 = vpack.c.bf16 %v347, %v345
    %v376 = vpack.c.bf16 %v350, %v348
    %v377 = vpack.c.bf16 %v351, %v349
    %v378 = vpack.c.bf16 %v354, %v352
    %v379 = vpack.c.bf16 %v355, %v353
    %v380 = vpack.c.bf16 %v358, %v356
    %v381 = vpack.c.bf16 %v359, %v357
    %v382 = vpack.c.bf16 %v362, %v360
    %v383 = vpack.c.bf16 %v363, %v361
    %v384 = vpack.c.bf16 %v366, %v364
    %v385 = vpack.c.bf16 %v367, %v365
    %v386 = vpack.c.bf16 %v370, %v368
    %v387 = vpack.c.bf16 %v371, %v369
    %v388 = vld [vmem:[#allocation2] sm:$0xff]
    %v389 = vld [vmem:[#allocation2 + $0x8] sm:$0xff]
    %v390 = vld [vmem:[#allocation2 + $0x10] sm:$0xff]
    %v391 = vld [vmem:[#allocation2 + $0x18] sm:$0xff]
    %v392 = vld [vmem:[#allocation2 + $0x20] sm:$0xff]
    %v393 = vld [vmem:[#allocation2 + $0x28] sm:$0xff]
    %v394 = vld [vmem:[#allocation2 + $0x30] sm:$0xff]
    %v395 = vld [vmem:[#allocation2 + $0x38] sm:$0xff]
    %v396 = vld [vmem:[#allocation2 + $0x40] sm:$0xff]
    %v397 = vld [vmem:[#allocation2 + $0x48] sm:$0xff]
    %v398 = vld [vmem:[#allocation2 + $0x50] sm:$0xff]
    %v399 = vld [vmem:[#allocation2 + $0x58] sm:$0xff]
    %v400 = vld [vmem:[#allocation2 + $0x60] sm:$0xff]
    %v401 = vld [vmem:[#allocation2 + $0x68] sm:$0xff]
    %v402 = vld [vmem:[#allocation2 + $0x70] sm:$0xff]
    %v403 = vld [vmem:[#allocation2 + $0x78] sm:$0xff]
    %v404 = vld [vmem:[#allocation2 + $0x80] sm:$0xff]
    %v405 = vld [vmem:[#allocation2 + $0x88] sm:$0xff]
    %v406 = vld [vmem:[#allocation2 + $0x90] sm:$0xff]
    %v407 = vld [vmem:[#allocation2 + $0x98] sm:$0xff]
    %v408 = vld [vmem:[#allocation2 + $0xa0] sm:$0xff]
    %v409 = vld [vmem:[#allocation2 + $0xa8] sm:$0xff]
    %v410 = vld [vmem:[#allocation2 + $0xb0] sm:$0xff]
    %v411 = vld [vmem:[#allocation2 + $0xb8] sm:$0xff]
    %v412 = vld [vmem:[#allocation2 + $0xc0] sm:$0xff]
    %v413 = vld [vmem:[#allocation2 + $0xc8] sm:$0xff]
    %v414 = vld [vmem:[#allocation2 + $0xd0] sm:$0xff]
    %v415 = vld [vmem:[#allocation2 + $0xd8] sm:$0xff]
    %v416 = vld [vmem:[#allocation2 + $0xe0] sm:$0xff]
    %v417 = vld [vmem:[#allocation2 + $0xe8] sm:$0xff]
    %v418 = vld [vmem:[#allocation2 + $0xf0] sm:$0xff]
    %v419 = vld [vmem:[#allocation2 + $0xf8] sm:$0xff]
    %v420 = vld [vmem:[%s4] sm:$0x3]
    %v422 = vlaneseq
    %v423 = vshrl.u32 %v422, 7
    %v424 = vsub.s32 0, %v423
    %v425 = vrot.slane %v420, %v424
    %v426 = vlaneseq
    %v427 = vshrl.u32 %v426, 7
    %v428 = vsub.s32 1, %v427
    %v429 = vrot.slane %v420, %v428
    %v464 = vunpack.c.l.b16 %v388
    %v465 = vunpack.c.h.b16 %v388
    %v466 = vunpack.c.l.b16 %v389
    %v467 = vunpack.c.h.b16 %v389
    %v468 = vunpack.c.l.b16 %v390
    %v469 = vunpack.c.h.b16 %v390
    %v470 = vunpack.c.l.b16 %v391
    %v471 = vunpack.c.h.b16 %v391
    %v472 = vunpack.c.l.b16 %v392
    %v473 = vunpack.c.h.b16 %v392
    %v474 = vunpack.c.l.b16 %v393
    %v475 = vunpack.c.h.b16 %v393
    %v476 = vunpack.c.l.b16 %v394
    %v477 = vunpack.c.h.b16 %v394
    %v478 = vunpack.c.l.b16 %v395
    %v479 = vunpack.c.h.b16 %v395
    %v480 = vunpack.c.l.b16 %v396
    %v481 = vunpack.c.h.b16 %v396
    %v482 = vunpack.c.l.b16 %v397
    %v483 = vunpack.c.h.b16 %v397
    %v484 = vunpack.c.l.b16 %v398
    %v485 = vunpack.c.h.b16 %v398
    %v486 = vunpack.c.l.b16 %v399
    %v487 = vunpack.c.h.b16 %v399
    %v488 = vunpack.c.l.b16 %v400
    %v489 = vunpack.c.h.b16 %v400
    %v490 = vunpack.c.l.b16 %v401
    %v491 = vunpack.c.h.b16 %v401
    %v492 = vunpack.c.l.b16 %v402
    %v493 = vunpack.c.h.b16 %v402
    %v494 = vunpack.c.l.b16 %v403
    %v495 = vunpack.c.h.b16 %v403
    %v496 = vunpack.c.l.b16 %v404
    %v497 = vunpack.c.h.b16 %v404
    %v498 = vunpack.c.l.b16 %v405
    %v499 = vunpack.c.h.b16 %v405
    %v500 = vunpack.c.l.b16 %v406
    %v501 = vunpack.c.h.b16 %v406
    %v502 = vunpack.c.l.b16 %v407
    %v503 = vunpack.c.h.b16 %v407
    %v504 = vunpack.c.l.b16 %v408
    %v505 = vunpack.c.h.b16 %v408
    %v506 = vunpack.c.l.b16 %v409
    %v507 = vunpack.c.h.b16 %v409
    %v508 = vunpack.c.l.b16 %v410
    %v509 = vunpack.c.h.b16 %v410
    %v510 = vunpack.c.l.b16 %v411
    %v511 = vunpack.c.h.b16 %v411
    %v512 = vunpack.c.l.b16 %v412
    %v513 = vunpack.c.h.b16 %v412
    %v514 = vunpack.c.l.b16 %v413
    %v515 = vunpack.c.h.b16 %v413
    %v516 = vunpack.c.l.b16 %v414
    %v517 = vunpack.c.h.b16 %v414
    %v518 = vunpack.c.l.b16 %v415
    %v519 = vunpack.c.h.b16 %v415
    %v520 = vunpack.c.l.b16 %v416
    %v521 = vunpack.c.h.b16 %v416
    %v522 = vunpack.c.l.b16 %v417
    %v523 = vunpack.c.h.b16 %v417
    %v524 = vunpack.c.l.b16 %v418
    %v525 = vunpack.c.h.b16 %v418
    %v526 = vunpack.c.l.b16 %v419
    %v527 = vunpack.c.h.b16 %v419
    %v528 = vpack.c.b16 %v466, %v464
    %v529 = vpack.c.b16 %v467, %v465
    %v530 = vpack.c.b16 %v470, %v468
    %v531 = vpack.c.b16 %v471, %v469
    %v532 = vpack.c.b16 %v474, %v472
    %v533 = vpack.c.b16 %v475, %v473
    %v534 = vpack.c.b16 %v478, %v476
    %v535 = vpack.c.b16 %v479, %v477
    %v536 = vpack.c.b16 %v482, %v480
    %v537 = vpack.c.b16 %v483, %v481
    %v538 = vpack.c.b16 %v486, %v484
    %v539 = vpack.c.b16 %v487, %v485
    %v540 = vpack.c.b16 %v490, %v488
    %v541 = vpack.c.b16 %v491, %v489
    %v542 = vpack.c.b16 %v494, %v492
    %v543 = vpack.c.b16 %v495, %v493
    %v544 = vpack.c.b16 %v498, %v496
    %v545 = vpack.c.b16 %v499, %v497
    %v546 = vpack.c.b16 %v502, %v500
    %v547 = vpack.c.b16 %v503, %v501
    %v548 = vpack.c.b16 %v506, %v504
    %v549 = vpack.c.b16 %v507, %v505
    %v550 = vpack.c.b16 %v510, %v508
    %v551 = vpack.c.b16 %v511, %v509
    %v552 = vpack.c.b16 %v514, %v512
    %v553 = vpack.c.b16 %v515, %v513
    %v554 = vpack.c.b16 %v518, %v516
    %v555 = vpack.c.b16 %v519, %v517
    %v556 = vpack.c.b16 %v522, %v520
    %v557 = vpack.c.b16 %v523, %v521
    %v558 = vpack.c.b16 %v526, %v524
    %v559 = vpack.c.b16 %v527, %v525
    %592 = vmatprep.subr.bf16.mxu0 %v529
    %593 = vmatpush1.bf16.msra.mxu0 %v528
    %594 = vmatprep.subr.bf16.mxu0 %v531
    %595 = vmatpush1.bf16.msra.mxu0 %v530
    %596 = vmatprep.subr.bf16.mxu0 %v533
    %597 = vmatpush1.bf16.msra.mxu0 %v532
    %598 = vmatprep.subr.bf16.mxu0 %v535
    %599 = vmatpush1.bf16.msra.mxu0 %v534
    %600 = vmatprep.subr.bf16.mxu0 %v537
    %601 = vmatpush1.bf16.msra.mxu0 %v536
    %602 = vmatprep.subr.bf16.mxu0 %v539
    %603 = vmatpush1.bf16.msra.mxu0 %v538
    %604 = vmatprep.subr.bf16.mxu0 %v541
    %605 = vmatpush1.bf16.msra.mxu0 %v540
    %606 = vmatprep.subr.bf16.mxu0 %v543
    %607 = vmatpush1.bf16.msra.mxu0 %v542
    %608 = vmatprep.subr.bf16.mxu0 %v545
    %609 = vmatpush1.bf16.msra.mxu0 %v544
    %610 = vmatprep.subr.bf16.mxu0 %v547
    %611 = vmatpush1.bf16.msra.mxu0 %v546
    %612 = vmatprep.subr.bf16.mxu0 %v549
    %613 = vmatpush1.bf16.msra.mxu0 %v548
    %614 = vmatprep.subr.bf16.mxu0 %v551
    %615 = vmatpush1.bf16.msra.mxu0 %v550
    %616 = vmatprep.subr.bf16.mxu0 %v553
    %617 = vmatpush1.bf16.msra.mxu0 %v552
    %618 = vmatprep.subr.bf16.mxu0 %v555
    %619 = vmatpush1.bf16.msra.mxu0 %v554
    %620 = vmatprep.subr.bf16.mxu0 %v557
    %621 = vmatpush1.bf16.msra.mxu0 %v556
    %622 = vmatprep.subr.bf16.mxu0 %v559
    %623 = vmatpush1.bf16.msra.mxu0 %v558
    %624 = vmatprep.mubr.bf16.mxu0 %v373
    %625 = vmatmul.mubr.bf16.gmra.mrb[0].mxu0 %v372
    %v626 = vpop.f32.mrb[0].mxu0
    %v627 = vadd.f32 %v425, %v626
    %v628 = vpop.f32.mrb[0].mxu0
    %v629 = vadd.f32 %v429, %v628
    %v630 = vpop.f32.mrb[0].mxu0
    %v631 = vadd.f32 %v425, %v630
    %v632 = vpop.f32.mrb[0].mxu0
    %v633 = vadd.f32 %v429, %v632
    %634 = vmatprep.mubr.bf16.mxu0 %v375
    %635 = vmatmul.mubr.bf16.gmra.mrb[0].mxu0 %v374
    %v636 = vpop.f32.mrb[0].mxu0
    %v637 = vadd.f32 %v425, %v636
    %v638 = vpop.f32.mrb[0].mxu0
    %v639 = vadd.f32 %v429, %v638
    %v640 = vpop.f32.mrb[0].mxu0
    %v641 = vadd.f32 %v425, %v640
    %v642 = vpop.f32.mrb[0].mxu0
    %v643 = vadd.f32 %v429, %v642
    %644 = vmatprep.mubr.bf16.mxu0 %v377
    %645 = vmatmul.mubr.bf16.gmra.mrb[0].mxu0 %v376
    %v646 = vpop.f32.mrb[0].mxu0
    %v647 = vadd.f32 %v425, %v646
    %v648 = vpop.f32.mrb[0].mxu0
    %v649 = vadd.f32 %v429, %v648
    %v650 = vpop.f32.mrb[0].mxu0
    %v651 = vadd.f32 %v425, %v650
    %v652 = vpop.f32.mrb[0].mxu0
    %v653 = vadd.f32 %v429, %v652
    %654 = vmatprep.mubr.bf16.mxu0 %v379
    %655 = vmatmul.mubr.bf16.gmra.mrb[0].mxu0 %v378
    %v656 = vpop.f32.mrb[0].mxu0
    %v657 = vadd.f32 %v425, %v656
    %v658 = vpop.f32.mrb[0].mxu0
    %v659 = vadd.f32 %v429, %v658
    %v660 = vpop.f32.mrb[0].mxu0
    %v661 = vadd.f32 %v425, %v660
    %v662 = vpop.f32.mrb[0].mxu0
    %v663 = vadd.f32 %v429, %v662
    %664 = vmatprep.mubr.bf16.mxu0 %v381
    %665 = vmatmul.mubr.bf16.gmra.mrb[0].mxu0 %v380
    %v666 = vpop.f32.mrb[0].mxu0
    %v667 = vadd.f32 %v425, %v666
    %v668 = vpop.f32.mrb[0].mxu0
    %v669 = vadd.f32 %v429, %v668
    %v670 = vpop.f32.mrb[0].mxu0
    %v671 = vadd.f32 %v425, %v670
    %v672 = vpop.f32.mrb[0].mxu0
    %v673 = vadd.f32 %v429, %v672
    %674 = vmatprep.mubr.bf16.mxu0 %v383
    %675 = vmatmul.mubr.bf16.gmra.mrb[0].mxu0 %v382
    %v676 = vpop.f32.mrb[0].mxu0
    %v677 = vadd.f32 %v425, %v676
    %v678 = vpop.f32.mrb[0].mxu0
    %v679 = vadd.f32 %v429, %v678
    %v680 = vpop.f32.mrb[0].mxu0
    %v681 = vadd.f32 %v425, %v680
    %v682 = vpop.f32.mrb[0].mxu0
    %v683 = vadd.f32 %v429, %v682
    %684 = vmatprep.mubr.bf16.mxu0 %v385
    %685 = vmatmul.mubr.bf16.gmra.mrb[0].mxu0 %v384
    %v686 = vpop.f32.mrb[0].mxu0
    %v687 = vadd.f32 %v425, %v686
    %v688 = vpop.f32.mrb[0].mxu0
    %v689 = vadd.f32 %v429, %v688
    %v690 = vpop.f32.mrb[0].mxu0
    %v691 = vadd.f32 %v425, %v690
    %v692 = vpop.f32.mrb[0].mxu0
    %v693 = vadd.f32 %v429, %v692
    %694 = vmatprep.mubr.bf16.mxu0 %v387
    %695 = vmatmul.mubr.bf16.gmra.mrb[0].mxu0 %v386
    %v696 = vpop.f32.mrb[0].mxu0
    %v697 = vadd.f32 %v425, %v696
    %v698 = vpop.f32.mrb[0].mxu0
    %v699 = vadd.f32 %v429, %v698
    %v700 = vpop.f32.mrb[0].mxu0
    %v701 = vadd.f32 %v425, %v700
    %v702 = vpop.f32.mrb[0].mxu0
    %v703 = vadd.f32 %v429, %v702
    %704 = vdwg.mxu0
    %v705 = vmax.f32 %v627, 0.0
    %v706 = vmax.f32 %v629, 0.0
    %v707 = vmax.f32 %v631, 0.0
    %v708 = vmax.f32 %v633, 0.0
    %v709 = vmax.f32 %v637, 0.0
    %v710 = vmax.f32 %v639, 0.0
    %v711 = vmax.f32 %v641, 0.0
    %v712 = vmax.f32 %v643, 0.0
    %v713 = vmax.f32 %v647, 0.0
    %v714 = vmax.f32 %v649, 0.0
    %v715 = vmax.f32 %v651, 0.0
    %v716 = vmax.f32 %v653, 0.0
    %v717 = vmax.f32 %v657, 0.0
    %v718 = vmax.f32 %v659, 0.0
    %v719 = vmax.f32 %v661, 0.0
    %v720 = vmax.f32 %v663, 0.0
    %v721 = vmax.f32 %v667, 0.0
    %v722 = vmax.f32 %v669, 0.0
    %v723 = vmax.f32 %v671, 0.0
    %v724 = vmax.f32 %v673, 0.0
    %v725 = vmax.f32 %v677, 0.0
    %v726 = vmax.f32 %v679, 0.0
    %v727 = vmax.f32 %v681, 0.0
    %v728 = vmax.f32 %v683, 0.0
    %v729 = vmax.f32 %v687, 0.0
    %v730 = vmax.f32 %v689, 0.0
    %v731 = vmax.f32 %v691, 0.0
    %v732 = vmax.f32 %v693, 0.0
    %v733 = vmax.f32 %v697, 0.0
    %v734 = vmax.f32 %v699, 0.0
    %v735 = vmax.f32 %v701, 0.0
    %v736 = vmax.f32 %v703, 0.0
    %v737 = vpack.c.bf16 %v707, %v705
    %v738 = vpack.c.bf16 %v708, %v706
    %v739 = vpack.c.bf16 %v711, %v709
    %v740 = vpack.c.bf16 %v712, %v710
    %v741 = vpack.c.bf16 %v715, %v713
    %v742 = vpack.c.bf16 %v716, %v714
    %v743 = vpack.c.bf16 %v719, %v717
    %v744 = vpack.c.bf16 %v720, %v718
    %v745 = vpack.c.bf16 %v723, %v721
    %v746 = vpack.c.bf16 %v724, %v722
    %v747 = vpack.c.bf16 %v727, %v725
    %v748 = vpack.c.bf16 %v728, %v726
    %v749 = vpack.c.bf16 %v731, %v729
    %v750 = vpack.c.bf16 %v732, %v730
    %v751 = vpack.c.bf16 %v735, %v733
    %v752 = vpack.c.bf16 %v736, %v734
    %s753 = scalar_lea.vmem [#allocation2], 256
    %v754 = vld [vmem:[%s753] sm:$0xff]
    %v755 = vld [vmem:[%s753 + $0x8] sm:$0xff]
    %v756 = vld [vmem:[%s753 + $0x10] sm:$0xff]
    %v757 = vld [vmem:[%s753 + $0x18] sm:$0xff]
    %v758 = vld [vmem:[%s753 + $0x20] sm:$0xff]
    %v759 = vld [vmem:[%s753 + $0x28] sm:$0xff]
    %v760 = vld [vmem:[%s753 + $0x30] sm:$0xff]
    %v761 = vld [vmem:[%s753 + $0x38] sm:$0xff]
    %v762 = vld [vmem:[%s753 + $0x40] sm:$0xff]
    %v763 = vld [vmem:[%s753 + $0x48] sm:$0xff]
    %v764 = vld [vmem:[%s753 + $0x50] sm:$0xff]
    %v765 = vld [vmem:[%s753 + $0x58] sm:$0xff]
    %v766 = vld [vmem:[%s753 + $0x60] sm:$0xff]
    %v767 = vld [vmem:[%s753 + $0x68] sm:$0xff]
    %v768 = vld [vmem:[%s753 + $0x70] sm:$0xff]
    %v769 = vld [vmem:[%s753 + $0x78] sm:$0xff]
    %v770 = vld [vmem:[%s753 + $0x80] sm:$0xff]
    %v771 = vld [vmem:[%s753 + $0x88] sm:$0xff]
    %v772 = vld [vmem:[%s753 + $0x90] sm:$0xff]
    %v773 = vld [vmem:[%s753 + $0x98] sm:$0xff]
    %v774 = vld [vmem:[%s753 + $0xa0] sm:$0xff]
    %v775 = vld [vmem:[%s753 + $0xa8] sm:$0xff]
    %v776 = vld [vmem:[%s753 + $0xb0] sm:$0xff]
    %v777 = vld [vmem:[%s753 + $0xb8] sm:$0xff]
    %v778 = vld [vmem:[%s753 + $0xc0] sm:$0xff]
    %v779 = vld [vmem:[%s753 + $0xc8] sm:$0xff]
    %v780 = vld [vmem:[%s753 + $0xd0] sm:$0xff]
    %v781 = vld [vmem:[%s753 + $0xd8] sm:$0xff]
    %v782 = vld [vmem:[%s753 + $0xe0] sm:$0xff]
    %v783 = vld [vmem:[%s753 + $0xe8] sm:$0xff]
    %v784 = vld [vmem:[%s753 + $0xf0] sm:$0xff]
    %v785 = vld [vmem:[%s753 + $0xf8] sm:$0xff]
    %s786 = scalar_lea.vmem %s4, 2
    %v787 = vld [vmem:[%s786] sm:$0x3]
    %v789 = vlaneseq
    %v790 = vshrl.u32 %v789, 7
    %v791 = vsub.s32 0, %v790
    %v792 = vrot.slane %v787, %v791
    %v793 = vlaneseq
    %v794 = vshrl.u32 %v793, 7
    %v795 = vsub.s32 1, %v794
    %v796 = vrot.slane %v787, %v795
    %v831 = vunpack.c.l.b16 %v754
    %v832 = vunpack.c.h.b16 %v754
    %v833 = vunpack.c.l.b16 %v755
    %v834 = vunpack.c.h.b16 %v755
    %v835 = vunpack.c.l.b16 %v756
    %v836 = vunpack.c.h.b16 %v756
    %v837 = vunpack.c.l.b16 %v757
    %v838 = vunpack.c.h.b16 %v757
    %v839 = vunpack.c.l.b16 %v758
    %v840 = vunpack.c.h.b16 %v758
    %v841 = vunpack.c.l.b16 %v759
    %v842 = vunpack.c.h.b16 %v759
    %v843 = vunpack.c.l.b16 %v760
    %v844 = vunpack.c.h.b16 %v760
    %v845 = vunpack.c.l.b16 %v761
    %v846 = vunpack.c.h.b16 %v761
    %v847 = vunpack.c.l.b16 %v762
    %v848 = vunpack.c.h.b16 %v762
    %v849 = vunpack.c.l.b16 %v763
    %v850 = vunpack.c.h.b16 %v763
    %v851 = vunpack.c.l.b16 %v764
    %v852 = vunpack.c.h.b16 %v764
    %v853 = vunpack.c.l.b16 %v765
    %v854 = vunpack.c.h.b16 %v765
    %v855 = vunpack.c.l.b16 %v766
    %v856 = vunpack.c.h.b16 %v766
    %v857 = vunpack.c.l.b16 %v767
    %v858 = vunpack.c.h.b16 %v767
    %v859 = vunpack.c.l.b16 %v768
    %v860 = vunpack.c.h.b16 %v768
    %v861 = vunpack.c.l.b16 %v769
    %v862 = vunpack.c.h.b16 %v769
    %v863 = vunpack.c.l.b16 %v770
    %v864 = vunpack.c.h.b16 %v770
    %v865 = vunpack.c.l.b16 %v771
    %v866 = vunpack.c.h.b16 %v771
    %v867 = vunpack.c.l.b16 %v772
    %v868 = vunpack.c.h.b16 %v772
    %v869 = vunpack.c.l.b16 %v773
    %v870 = vunpack.c.h.b16 %v773
    %v871 = vunpack.c.l.b16 %v774
    %v872 = vunpack.c.h.b16 %v774
    %v873 = vunpack.c.l.b16 %v775
    %v874 = vunpack.c.h.b16 %v775
    %v875 = vunpack.c.l.b16 %v776
    %v876 = vunpack.c.h.b16 %v776
    %v877 = vunpack.c.l.b16 %v777
    %v878 = vunpack.c.h.b16 %v777
    %v879 = vunpack.c.l.b16 %v778
    %v880 = vunpack.c.h.b16 %v778
    %v881 = vunpack.c.l.b16 %v779
    %v882 = vunpack.c.h.b16 %v779
    %v883 = vunpack.c.l.b16 %v780
    %v884 = vunpack.c.h.b16 %v780
    %v885 = vunpack.c.l.b16 %v781
    %v886 = vunpack.c.h.b16 %v781
    %v887 = vunpack.c.l.b16 %v782
    %v888 = vunpack.c.h.b16 %v782
    %v889 = vunpack.c.l.b16 %v783
    %v890 = vunpack.c.h.b16 %v783
    %v891 = vunpack.c.l.b16 %v784
    %v892 = vunpack.c.h.b16 %v784
    %v893 = vunpack.c.l.b16 %v785
    %v894 = vunpack.c.h.b16 %v785
    %v895 = vpack.c.b16 %v833, %v831
    %v896 = vpack.c.b16 %v834, %v832
    %v897 = vpack.c.b16 %v837, %v835
    %v898 = vpack.c.b16 %v838, %v836
    %v899 = vpack.c.b16 %v841, %v839
    %v900 = vpack.c.b16 %v842, %v840
    %v901 = vpack.c.b16 %v845, %v843
    %v902 = vpack.c.b16 %v846, %v844
    %v903 = vpack.c.b16 %v849, %v847
    %v904 = vpack.c.b16 %v850, %v848
    %v905 = vpack.c.b16 %v853, %v851
    %v906 = vpack.c.b16 %v854, %v852
    %v907 = vpack.c.b16 %v857, %v855
    %v908 = vpack.c.b16 %v858, %v856
    %v909 = vpack.c.b16 %v861, %v859
    %v910 = vpack.c.b16 %v862, %v860
    %v911 = vpack.c.b16 %v865, %v863
    %v912 = vpack.c.b16 %v866, %v864
    %v913 = vpack.c.b16 %v869, %v867
    %v914 = vpack.c.b16 %v870, %v868
    %v915 = vpack.c.b16 %v873, %v871
    %v916 = vpack.c.b16 %v874, %v872
    %v917 = vpack.c.b16 %v877, %v875
    %v918 = vpack.c.b16 %v878, %v876
    %v919 = vpack.c.b16 %v881, %v879
    %v920 = vpack.c.b16 %v882, %v880
    %v921 = vpack.c.b16 %v885, %v883
    %v922 = vpack.c.b16 %v886, %v884
    %v923 = vpack.c.b16 %v889, %v887
    %v924 = vpack.c.b16 %v890, %v888
    %v925 = vpack.c.b16 %v893, %v891
    %v926 = vpack.c.b16 %v894, %v892
    %959 = vmatprep.subr.bf16.mxu0 %v896
    %960 = vmatpush1.bf16.msra.mxu0 %v895
    %961 = vmatprep.subr.bf16.mxu0 %v898
    %962 = vmatpush1.bf16.msra.mxu0 %v897
    %963 = vmatprep.subr.bf16.mxu0 %v900
    %964 = vmatpush1.bf16.msra.mxu0 %v899
    %965 = vmatprep.subr.bf16.mxu0 %v902
    %966 = vmatpush1.bf16.msra.mxu0 %v901
    %967 = vmatprep.subr.bf16.mxu0 %v904
    %968 = vmatpush1.bf16.msra.mxu0 %v903
    %969 = vmatprep.subr.bf16.mxu0 %v906
    %970 = vmatpush1.bf16.msra.mxu0 %v905
    %971 = vmatprep.subr.bf16.mxu0 %v908
    %972 = vmatpush1.bf16.msra.mxu0 %v907
    %973 = vmatprep.subr.bf16.mxu0 %v910
    %974 = vmatpush1.bf16.msra.mxu0 %v909
    %975 = vmatprep.subr.bf16.mxu0 %v912
    %976 = vmatpush1.bf16.msra.mxu0 %v911
    %977 = vmatprep.subr.bf16.mxu0 %v914
    %978 = vmatpush1.bf16.msra.mxu0 %v913
    %979 = vmatprep.subr.bf16.mxu0 %v916
    %980 = vmatpush1.bf16.msra.mxu0 %v915
    %981 = vmatprep.subr.bf16.mxu0 %v918
    %982 = vmatpush1.bf16.msra.mxu0 %v917
    %983 = vmatprep.subr.bf16.mxu0 %v920
    %984 = vmatpush1.bf16.msra.mxu0 %v919
    %985 = vmatprep.subr.bf16.mxu0 %v922
    %986 = vmatpush1.bf16.msra.mxu0 %v921
    %987 = vmatprep.subr.bf16.mxu0 %v924
    %988 = vmatpush1.bf16.msra.mxu0 %v923
    %989 = vmatprep.subr.bf16.mxu0 %v926
    %990 = vmatpush1.bf16.msra.mxu0 %v925
    %991 = vmatprep.mubr.bf16.mxu0 %v738
    %992 = vmatmul.mubr.bf16.gmra.mrb[0].mxu0 %v737
    %v993 = vpop.f32.mrb[0].mxu0
    %v994 = vadd.f32 %v792, %v993
    %v995 = vpop.f32.mrb[0].mxu0
    %v996 = vadd.f32 %v796, %v995
    %v997 = vpop.f32.mrb[0].mxu0
    %v998 = vadd.f32 %v792, %v997
    %v999 = vpop.f32.mrb[0].mxu0
    %v1000 = vadd.f32 %v796, %v999
    %1001 = vmatprep.mubr.bf16.mxu0 %v740
    %1002 = vmatmul.mubr.bf16.gmra.mrb[0].mxu0 %v739
    %v1003 = vpop.f32.mrb[0].mxu0
    %v1004 = vadd.f32 %v792, %v1003
    %v1005 = vpop.f32.mrb[0].mxu0
    %v1006 = vadd.f32 %v796, %v1005
    %v1007 = vpop.f32.mrb[0].mxu0
    %v1008 = vadd.f32 %v792, %v1007
    %v1009 = vpop.f32.mrb[0].mxu0
    %v1010 = vadd.f32 %v796, %v1009
    %1011 = vmatprep.mubr.bf16.mxu0 %v742
    %1012 = vmatmul.mubr.bf16.gmra.mrb[0].mxu0 %v741
    %v1013 = vpop.f32.mrb[0].mxu0
    %v1014 = vadd.f32 %v792, %v1013
    %v1015 = vpop.f32.mrb[0].mxu0
    %v1016 = vadd.f32 %v796, %v1015
    %v1017 = vpop.f32.mrb[0].mxu0
    %v1018 = vadd.f32 %v792, %v1017
    %v1019 = vpop.f32.mrb[0].mxu0
    %v1020 = vadd.f32 %v796, %v1019
    %1021 = vmatprep.mubr.bf16.mxu0 %v744
    %1022 = vmatmul.mubr.bf16.gmra.mrb[0].mxu0 %v743
    %v1023 = vpop.f32.mrb[0].mxu0
    %v1024 = vadd.f32 %v792, %v1023
    %v1025 = vpop.f32.mrb[0].mxu0
    %v1026 = vadd.f32 %v796, %v1025
    %v1027 = vpop.f32.mrb[0].mxu0
    %v1028 = vadd.f32 %v792, %v1027
    %v1029 = vpop.f32.mrb[0].mxu0
    %v1030 = vadd.f32 %v796, %v1029
    %1031 = vmatprep.mubr.bf16.mxu0 %v746
    %1032 = vmatmul.mubr.bf16.gmra.mrb[0].mxu0 %v745
    %v1033 = vpop.f32.mrb[0].mxu0
    %v1034 = vadd.f32 %v792, %v1033
    %v1035 = vpop.f32.mrb[0].mxu0
    %v1036 = vadd.f32 %v796, %v1035
    %v1037 = vpop.f32.mrb[0].mxu0
    %v1038 = vadd.f32 %v792, %v1037
    %v1039 = vpop.f32.mrb[0].mxu0
    %v1040 = vadd.f32 %v796, %v1039
    %1041 = vmatprep.mubr.bf16.mxu0 %v748
    %1042 = vmatmul.mubr.bf16.gmra.mrb[0].mxu0 %v747
    %v1043 = vpop.f32.mrb[0].mxu0
    %v1044 = vadd.f32 %v792, %v1043
    %v1045 = vpop.f32.mrb[0].mxu0
    %v1046 = vadd.f32 %v796, %v1045
    %v1047 = vpop.f32.mrb[0].mxu0
    %v1048 = vadd.f32 %v792, %v1047
    %v1049 = vpop.f32.mrb[0].mxu0
    %v1050 = vadd.f32 %v796, %v1049
    %1051 = vmatprep.mubr.bf16.mxu0 %v750
    %1052 = vmatmul.mubr.bf16.gmra.mrb[0].mxu0 %v749
    %v1053 = vpop.f32.mrb[0].mxu0
    %v1054 = vadd.f32 %v792, %v1053
    %v1055 = vpop.f32.mrb[0].mxu0
    %v1056 = vadd.f32 %v796, %v1055
    %v1057 = vpop.f32.mrb[0].mxu0
    %v1058 = vadd.f32 %v792, %v1057
    %v1059 = vpop.f32.mrb[0].mxu0
    %v1060 = vadd.f32 %v796, %v1059
    %1061 = vmatprep.mubr.bf16.mxu0 %v752
    %1062 = vmatmul.mubr.bf16.gmra.mrb[0].mxu0 %v751
    %v1063 = vpop.f32.mrb[0].mxu0
    %v1064 = vadd.f32 %v792, %v1063
    %v1065 = vpop.f32.mrb[0].mxu0
    %v1066 = vadd.f32 %v796, %v1065
    %v1067 = vpop.f32.mrb[0].mxu0
    %v1068 = vadd.f32 %v792, %v1067
    %v1069 = vpop.f32.mrb[0].mxu0
    %v1070 = vadd.f32 %v796, %v1069
    %1071 = vdwg.mxu0
    %v1072 = vmax.f32 %v994, 0.0
    %v1073 = vmax.f32 %v996, 0.0
    %v1074 = vmax.f32 %v998, 0.0
    %v1075 = vmax.f32 %v1000, 0.0
    %v1076 = vmax.f32 %v1004, 0.0
    %v1077 = vmax.f32 %v1006, 0.0
    %v1078 = vmax.f32 %v1008, 0.0
    %v1079 = vmax.f32 %v1010, 0.0
    %v1080 = vmax.f32 %v1014, 0.0
    %v1081 = vmax.f32 %v1016, 0.0
    %v1082 = vmax.f32 %v1018, 0.0
    %v1083 = vmax.f32 %v1020, 0.0
    %v1084 = vmax.f32 %v1024, 0.0
    %v1085 = vmax.f32 %v1026, 0.0
    %v1086 = vmax.f32 %v1028, 0.0
    %v1087 = vmax.f32 %v1030, 0.0
    %v1088 = vmax.f32 %v1034, 0.0
    %v1089 = vmax.f32 %v1036, 0.0
    %v1090 = vmax.f32 %v1038, 0.0
    %v1091 = vmax.f32 %v1040, 0.0
    %v1092 = vmax.f32 %v1044, 0.0
    %v1093 = vmax.f32 %v1046, 0.0
    %v1094 = vmax.f32 %v1048, 0.0
    %v1095 = vmax.f32 %v1050, 0.0
    %v1096 = vmax.f32 %v1054, 0.0
    %v1097 = vmax.f32 %v1056, 0.0
    %v1098 = vmax.f32 %v1058, 0.0
    %v1099 = vmax.f32 %v1060, 0.0
    %v1100 = vmax.f32 %v1064, 0.0
    %v1101 = vmax.f32 %v1066, 0.0
    %v1102 = vmax.f32 %v1068, 0.0
    %v1103 = vmax.f32 %v1070, 0.0
    %v1104 = vpack.c.bf16 %v1074, %v1072
    %v1105 = vpack.c.bf16 %v1075, %v1073
    %v1106 = vpack.c.bf16 %v1078, %v1076
    %v1107 = vpack.c.bf16 %v1079, %v1077
    %v1108 = vpack.c.bf16 %v1082, %v1080
    %v1109 = vpack.c.bf16 %v1083, %v1081
    %v1110 = vpack.c.bf16 %v1086, %v1084
    %v1111 = vpack.c.bf16 %v1087, %v1085
    %v1112 = vpack.c.bf16 %v1090, %v1088
    %v1113 = vpack.c.bf16 %v1091, %v1089
    %v1114 = vpack.c.bf16 %v1094, %v1092
    %v1115 = vpack.c.bf16 %v1095, %v1093
    %v1116 = vpack.c.bf16 %v1098, %v1096
    %v1117 = vpack.c.bf16 %v1099, %v1097
    %v1118 = vpack.c.bf16 %v1102, %v1100
    %v1119 = vpack.c.bf16 %v1103, %v1101
    %s1120 = scalar_lea.vmem [#allocation2], 512
    %v1121 = vld [vmem:[%s1120] sm:$0xff]
    %v1122 = vld [vmem:[%s1120 + $0x8] sm:$0xff]
    %v1123 = vld [vmem:[%s1120 + $0x10] sm:$0xff]
    %v1124 = vld [vmem:[%s1120 + $0x18] sm:$0xff]
    %v1125 = vld [vmem:[%s1120 + $0x20] sm:$0xff]
    %v1126 = vld [vmem:[%s1120 + $0x28] sm:$0xff]
    %v1127 = vld [vmem:[%s1120 + $0x30] sm:$0xff]
    %v1128 = vld [vmem:[%s1120 + $0x38] sm:$0xff]
    %v1129 = vld [vmem:[%s1120 + $0x40] sm:$0xff]
    %v1130 = vld [vmem:[%s1120 + $0x48] sm:$0xff]
    %v1131 = vld [vmem:[%s1120 + $0x50] sm:$0xff]
    %v1132 = vld [vmem:[%s1120 + $0x58] sm:$0xff]
    %v1133 = vld [vmem:[%s1120 + $0x60] sm:$0xff]
    %v1134 = vld [vmem:[%s1120 + $0x68] sm:$0xff]
    %v1135 = vld [vmem:[%s1120 + $0x70] sm:$0xff]
    %v1136 = vld [vmem:[%s1120 + $0x78] sm:$0xff]
    %v1137 = vld [vmem:[%s1120 + $0x80] sm:$0xff]
    %v1138 = vld [vmem:[%s1120 + $0x88] sm:$0xff]
    %v1139 = vld [vmem:[%s1120 + $0x90] sm:$0xff]
    %v1140 = vld [vmem:[%s1120 + $0x98] sm:$0xff]
    %v1141 = vld [vmem:[%s1120 + $0xa0] sm:$0xff]
    %v1142 = vld [vmem:[%s1120 + $0xa8] sm:$0xff]
    %v1143 = vld [vmem:[%s1120 + $0xb0] sm:$0xff]
    %v1144 = vld [vmem:[%s1120 + $0xb8] sm:$0xff]
    %v1145 = vld [vmem:[%s1120 + $0xc0] sm:$0xff]
    %v1146 = vld [vmem:[%s1120 + $0xc8] sm:$0xff]
    %v1147 = vld [vmem:[%s1120 + $0xd0] sm:$0xff]
    %v1148 = vld [vmem:[%s1120 + $0xd8] sm:$0xff]
    %v1149 = vld [vmem:[%s1120 + $0xe0] sm:$0xff]
    %v1150 = vld [vmem:[%s1120 + $0xe8] sm:$0xff]
    %v1151 = vld [vmem:[%s1120 + $0xf0] sm:$0xff]
    %v1152 = vld [vmem:[%s1120 + $0xf8] sm:$0xff]
    %s1153 = scalar_lea.vmem %s4, 4
    %v1154 = vld [vmem:[%s1153] sm:$0x3]
    %v1156 = vlaneseq
    %v1157 = vshrl.u32 %v1156, 7
    %v1158 = vsub.s32 0, %v1157
    %v1159 = vrot.slane %v1154, %v1158
    %v1160 = vlaneseq
    %v1161 = vshrl.u32 %v1160, 7
    %v1162 = vsub.s32 1, %v1161
    %v1163 = vrot.slane %v1154, %v1162
    %v1198 = vunpack.c.l.b16 %v1121
    %v1199 = vunpack.c.h.b16 %v1121
    %v1200 = vunpack.c.l.b16 %v1122
    %v1201 = vunpack.c.h.b16 %v1122
    %v1202 = vunpack.c.l.b16 %v1123
    %v1203 = vunpack.c.h.b16 %v1123
    %v1204 = vunpack.c.l.b16 %v1124
    %v1205 = vunpack.c.h.b16 %v1124
    %v1206 = vunpack.c.l.b16 %v1125
    %v1207 = vunpack.c.h.b16 %v1125
    %v1208 = vunpack.c.l.b16 %v1126
    %v1209 = vunpack.c.h.b16 %v1126
    %v1210 = vunpack.c.l.b16 %v1127
    %v1211 = vunpack.c.h.b16 %v1127
    %v1212 = vunpack.c.l.b16 %v1128
    %v1213 = vunpack.c.h.b16 %v1128
    %v1214 = vunpack.c.l.b16 %v1129
    %v1215 = vunpack.c.h.b16 %v1129
    %v1216 = vunpack.c.l.b16 %v1130
    %v1217 = vunpack.c.h.b16 %v1130
    %v1218 = vunpack.c.l.b16 %v1131
    %v1219 = vunpack.c.h.b16 %v1131
    %v1220 = vunpack.c.l.b16 %v1132
    %v1221 = vunpack.c.h.b16 %v1132
    %v1222 = vunpack.c.l.b16 %v1133
    %v1223 = vunpack.c.h.b16 %v1133
    %v1224 = vunpack.c.l.b16 %v1134
    %v1225 = vunpack.c.h.b16 %v1134
    %v1226 = vunpack.c.l.b16 %v1135
    %v1227 = vunpack.c.h.b16 %v1135
    %v1228 = vunpack.c.l.b16 %v1136
    %v1229 = vunpack.c.h.b16 %v1136
    %v1230 = vunpack.c.l.b16 %v1137
    %v1231 = vunpack.c.h.b16 %v1137
    %v1232 = vunpack.c.l.b16 %v1138
    %v1233 = vunpack.c.h.b16 %v1138
    %v1234 = vunpack.c.l.b16 %v1139
    %v1235 = vunpack.c.h.b16 %v1139
    %v1236 = vunpack.c.l.b16 %v1140
    %v1237 = vunpack.c.h.b16 %v1140
    %v1238 = vunpack.c.l.b16 %v1141
    %v1239 = vunpack.c.h.b16 %v1141
    %v1240 = vunpack.c.l.b16 %v1142
    %v1241 = vunpack.c.h.b16 %v1142
    %v1242 = vunpack.c.l.b16 %v1143
    %v1243 = vunpack.c.h.b16 %v1143
    %v1244 = vunpack.c.l.b16 %v1144
    %v1245 = vunpack.c.h.b16 %v1144
    %v1246 = vunpack.c.l.b16 %v1145
    %v1247 = vunpack.c.h.b16 %v1145
    %v1248 = vunpack.c.l.b16 %v1146
    %v1249 = vunpack.c.h.b16 %v1146
    %v1250 = vunpack.c.l.b16 %v1147
    %v1251 = vunpack.c.h.b16 %v1147
    %v1252 = vunpack.c.l.b16 %v1148
    %v1253 = vunpack.c.h.b16 %v1148
    %v1254 = vunpack.c.l.b16 %v1149
    %v1255 = vunpack.c.h.b16 %v1149
    %v1256 = vunpack.c.l.b16 %v1150
    %v1257 = vunpack.c.h.b16 %v1150
    %v1258 = vunpack.c.l.b16 %v1151
    %v1259 = vunpack.c.h.b16 %v1151
    %v1260 = vunpack.c.l.b16 %v1152
    %v1261 = vunpack.c.h.b16 %v1152
    %v1262 = vpack.c.b16 %v1200, %v1198
    %v1263 = vpack.c.b16 %v1201, %v1199
    %v1264 = vpack.c.b16 %v1204, %v1202
    %v1265 = vpack.c.b16 %v1205, %v1203
    %v1266 = vpack.c.b16 %v1208, %v1206
    %v1267 = vpack.c.b16 %v1209, %v1207
    %v1268 = vpack.c.b16 %v1212, %v1210
    %v1269 = vpack.c.b16 %v1213, %v1211
    %v1270 = vpack.c.b16 %v1216, %v1214
    %v1271 = vpack.c.b16 %v1217, %v1215
    %v1272 = vpack.c.b16 %v1220, %v1218
    %v1273 = vpack.c.b16 %v1221, %v1219
    %v1274 = vpack.c.b16 %v1224, %v1222
    %v1275 = vpack.c.b16 %v1225, %v1223
    %v1276 = vpack.c.b16 %v1228, %v1226
    %v1277 = vpack.c.b16 %v1229, %v1227
    %v1278 = vpack.c.b16 %v1232, %v1230
    %v1279 = vpack.c.b16 %v1233, %v1231
    %v1280 = vpack.c.b16 %v1236, %v1234
    %v1281 = vpack.c.b16 %v1237, %v1235
    %v1282 = vpack.c.b16 %v1240, %v1238
    %v1283 = vpack.c.b16 %v1241, %v1239
    %v1284 = vpack.c.b16 %v1244, %v1242
    %v1285 = vpack.c.b16 %v1245, %v1243
    %v1286 = vpack.c.b16 %v1248, %v1246
    %v1287 = vpack.c.b16 %v1249, %v1247
    %v1288 = vpack.c.b16 %v1252, %v1250
    %v1289 = vpack.c.b16 %v1253, %v1251
    %v1290 = vpack.c.b16 %v1256, %v1254
    %v1291 = vpack.c.b16 %v1257, %v1255
    %v1292 = vpack.c.b16 %v1260, %v1258
    %v1293 = vpack.c.b16 %v1261, %v1259
    %1326 = vmatprep.subr.bf16.mxu0 %v1263
    %1327 = vmatpush1.bf16.msra.mxu0 %v1262
    %1328 = vmatprep.subr.bf16.mxu0 %v1265
    %1329 = vmatpush1.bf16.msra.mxu0 %v1264
    %1330 = vmatprep.subr.bf16.mxu0 %v1267
    %1331 = vmatpush1.bf16.msra.mxu0 %v1266
    %1332 = vmatprep.subr.bf16.mxu0 %v1269
    %1333 = vmatpush1.bf16.msra.mxu0 %v1268
    %1334 = vmatprep.subr.bf16.mxu0 %v1271
    %1335 = vmatpush1.bf16.msra.mxu0 %v1270
    %1336 = vmatprep.subr.bf16.mxu0 %v1273
    %1337 = vmatpush1.bf16.msra.mxu0 %v1272
    %1338 = vmatprep.subr.bf16.mxu0 %v1275
    %1339 = vmatpush1.bf16.msra.mxu0 %v1274
    %1340 = vmatprep.subr.bf16.mxu0 %v1277
    %1341 = vmatpush1.bf16.msra.mxu0 %v1276
    %1342 = vmatprep.subr.bf16.mxu0 %v1279
    %1343 = vmatpush1.bf16.msra.mxu0 %v1278
    %1344 = vmatprep.subr.bf16.mxu0 %v1281
    %1345 = vmatpush1.bf16.msra.mxu0 %v1280
    %1346 = vmatprep.subr.bf16.mxu0 %v1283
    %1347 = vmatpush1.bf16.msra.mxu0 %v1282
    %1348 = vmatprep.subr.bf16.mxu0 %v1285
    %1349 = vmatpush1.bf16.msra.mxu0 %v1284
    %1350 = vmatprep.subr.bf16.mxu0 %v1287
    %1351 = vmatpush1.bf16.msra.mxu0 %v1286
    %1352 = vmatprep.subr.bf16.mxu0 %v1289
    %1353 = vmatpush1.bf16.msra.mxu0 %v1288
    %1354 = vmatprep.subr.bf16.mxu0 %v1291
    %1355 = vmatpush1.bf16.msra.mxu0 %v1290
    %1356 = vmatprep.subr.bf16.mxu0 %v1293
    %1357 = vmatpush1.bf16.msra.mxu0 %v1292
    %1358 = vmatprep.mubr.bf16.mxu0 %v1105
    %1359 = vmatmul.mubr.bf16.gmra.mrb[0].mxu0 %v1104
    %v1360 = vpop.f32.mrb[0].mxu0
    %v1361 = vadd.f32 %v1159, %v1360
    %v1362 = vpop.f32.mrb[0].mxu0
    %v1363 = vadd.f32 %v1163, %v1362
    %v1364 = vpop.f32.mrb[0].mxu0
    %v1365 = vadd.f32 %v1159, %v1364
    %v1366 = vpop.f32.mrb[0].mxu0
    %v1367 = vadd.f32 %v1163, %v1366
    %1368 = vmatprep.mubr.bf16.mxu0 %v1107
    %1369 = vmatmul.mubr.bf16.gmra.mrb[0].mxu0 %v1106
    %v1370 = vpop.f32.mrb[0].mxu0
    %v1371 = vadd.f32 %v1159, %v1370
    %v1372 = vpop.f32.mrb[0].mxu0
    %v1373 = vadd.f32 %v1163, %v1372
    %v1374 = vpop.f32.mrb[0].mxu0
    %v1375 = vadd.f32 %v1159, %v1374
    %v1376 = vpop.f32.mrb[0].mxu0
    %v1377 = vadd.f32 %v1163, %v1376
    %1378 = vmatprep.mubr.bf16.mxu0 %v1109
    %1379 = vmatmul.mubr.bf16.gmra.mrb[0].mxu0 %v1108
    %v1380 = vpop.f32.mrb[0].mxu0
    %v1381 = vadd.f32 %v1159, %v1380
    %v1382 = vpop.f32.mrb[0].mxu0
    %v1383 = vadd.f32 %v1163, %v1382
    %v1384 = vpop.f32.mrb[0].mxu0
    %v1385 = vadd.f32 %v1159, %v1384
    %v1386 = vpop.f32.mrb[0].mxu0
    %v1387 = vadd.f32 %v1163, %v1386
    %1388 = vmatprep.mubr.bf16.mxu0 %v1111
    %1389 = vmatmul.mubr.bf16.gmra.mrb[0].mxu0 %v1110
    %v1390 = vpop.f32.mrb[0].mxu0
    %v1391 = vadd.f32 %v1159, %v1390
    %v1392 = vpop.f32.mrb[0].mxu0
    %v1393 = vadd.f32 %v1163, %v1392
    %v1394 = vpop.f32.mrb[0].mxu0
    %v1395 = vadd.f32 %v1159, %v1394
    %v1396 = vpop.f32.mrb[0].mxu0
    %v1397 = vadd.f32 %v1163, %v1396
    %1398 = vmatprep.mubr.bf16.mxu0 %v1113
    %1399 = vmatmul.mubr.bf16.gmra.mrb[0].mxu0 %v1112
    %v1400 = vpop.f32.mrb[0].mxu0
    %v1401 = vadd.f32 %v1159, %v1400
    %v1402 = vpop.f32.mrb[0].mxu0
    %v1403 = vadd.f32 %v1163, %v1402
    %v1404 = vpop.f32.mrb[0].mxu0
    %v1405 = vadd.f32 %v1159, %v1404
    %v1406 = vpop.f32.mrb[0].mxu0
    %v1407 = vadd.f32 %v1163, %v1406
    %1408 = vmatprep.mubr.bf16.mxu0 %v1115
    %1409 = vmatmul.mubr.bf16.gmra.mrb[0].mxu0 %v1114
    %v1410 = vpop.f32.mrb[0].mxu0
    %v1411 = vadd.f32 %v1159, %v1410
    %v1412 = vpop.f32.mrb[0].mxu0
    %v1413 = vadd.f32 %v1163, %v1412
    %v1414 = vpop.f32.mrb[0].mxu0
    %v1415 = vadd.f32 %v1159, %v1414
    %v1416 = vpop.f32.mrb[0].mxu0
    %v1417 = vadd.f32 %v1163, %v1416
    %1418 = vmatprep.mubr.bf16.mxu0 %v1117
    %1419 = vmatmul.mubr.bf16.gmra.mrb[0].mxu0 %v1116
    %v1420 = vpop.f32.mrb[0].mxu0
    %v1421 = vadd.f32 %v1159, %v1420
    %v1422 = vpop.f32.mrb[0].mxu0
    %v1423 = vadd.f32 %v1163, %v1422
    %v1424 = vpop.f32.mrb[0].mxu0
    %v1425 = vadd.f32 %v1159, %v1424
    %v1426 = vpop.f32.mrb[0].mxu0
    %v1427 = vadd.f32 %v1163, %v1426
    %1428 = vmatprep.mubr.bf16.mxu0 %v1119
    %1429 = vmatmul.mubr.bf16.gmra.mrb[0].mxu0 %v1118
    %v1430 = vpop.f32.mrb[0].mxu0
    %v1431 = vadd.f32 %v1159, %v1430
    %v1432 = vpop.f32.mrb[0].mxu0
    %v1433 = vadd.f32 %v1163, %v1432
    %v1434 = vpop.f32.mrb[0].mxu0
    %v1435 = vadd.f32 %v1159, %v1434
    %v1436 = vpop.f32.mrb[0].mxu0
    %v1437 = vadd.f32 %v1163, %v1436
    %1438 = vdwg.mxu0
    %v1439 = vmax.f32 %v1361, 0.0
    %v1440 = vmax.f32 %v1363, 0.0
    %v1441 = vmax.f32 %v1365, 0.0
    %v1442 = vmax.f32 %v1367, 0.0
    %v1443 = vmax.f32 %v1371, 0.0
    %v1444 = vmax.f32 %v1373, 0.0
    %v1445 = vmax.f32 %v1375, 0.0
    %v1446 = vmax.f32 %v1377, 0.0
    %v1447 = vmax.f32 %v1381, 0.0
    %v1448 = vmax.f32 %v1383, 0.0
    %v1449 = vmax.f32 %v1385, 0.0
    %v1450 = vmax.f32 %v1387, 0.0
    %v1451 = vmax.f32 %v1391, 0.0
    %v1452 = vmax.f32 %v1393, 0.0
    %v1453 = vmax.f32 %v1395, 0.0
    %v1454 = vmax.f32 %v1397, 0.0
    %v1455 = vmax.f32 %v1401, 0.0
    %v1456 = vmax.f32 %v1403, 0.0
    %v1457 = vmax.f32 %v1405, 0.0
    %v1458 = vmax.f32 %v1407, 0.0
    %v1459 = vmax.f32 %v1411, 0.0
    %v1460 = vmax.f32 %v1413, 0.0
    %v1461 = vmax.f32 %v1415, 0.0
    %v1462 = vmax.f32 %v1417, 0.0
    %v1463 = vmax.f32 %v1421, 0.0
    %v1464 = vmax.f32 %v1423, 0.0
    %v1465 = vmax.f32 %v1425, 0.0
    %v1466 = vmax.f32 %v1427, 0.0
    %v1467 = vmax.f32 %v1431, 0.0
    %v1468 = vmax.f32 %v1433, 0.0
    %v1469 = vmax.f32 %v1435, 0.0
    %v1470 = vmax.f32 %v1437, 0.0
    %v1471 = vpack.c.bf16 %v1441, %v1439
    %v1472 = vpack.c.bf16 %v1442, %v1440
    %v1473 = vpack.c.bf16 %v1445, %v1443
    %v1474 = vpack.c.bf16 %v1446, %v1444
    %v1475 = vpack.c.bf16 %v1449, %v1447
    %v1476 = vpack.c.bf16 %v1450, %v1448
    %v1477 = vpack.c.bf16 %v1453, %v1451
    %v1478 = vpack.c.bf16 %v1454, %v1452
    %v1479 = vpack.c.bf16 %v1457, %v1455
    %v1480 = vpack.c.bf16 %v1458, %v1456
    %v1481 = vpack.c.bf16 %v1461, %v1459
    %v1482 = vpack.c.bf16 %v1462, %v1460
    %v1483 = vpack.c.bf16 %v1465, %v1463
    %v1484 = vpack.c.bf16 %v1466, %v1464
    %v1485 = vpack.c.bf16 %v1469, %v1467
    %v1486 = vpack.c.bf16 %v1470, %v1468
    %s1487 = scalar_lea.vmem [#allocation2], 768
    %v1488 = vld [vmem:[%s1487] sm:$0xff]
    %v1489 = vld [vmem:[%s1487 + $0x8] sm:$0xff]
    %v1490 = vld [vmem:[%s1487 + $0x10] sm:$0xff]
    %v1491 = vld [vmem:[%s1487 + $0x18] sm:$0xff]
    %v1492 = vld [vmem:[%s1487 + $0x20] sm:$0xff]
    %v1493 = vld [vmem:[%s1487 + $0x28] sm:$0xff]
    %v1494 = vld [vmem:[%s1487 + $0x30] sm:$0xff]
    %v1495 = vld [vmem:[%s1487 + $0x38] sm:$0xff]
    %v1496 = vld [vmem:[%s1487 + $0x40] sm:$0xff]
    %v1497 = vld [vmem:[%s1487 + $0x48] sm:$0xff]
    %v1498 = vld [vmem:[%s1487 + $0x50] sm:$0xff]
    %v1499 = vld [vmem:[%s1487 + $0x58] sm:$0xff]
    %v1500 = vld [vmem:[%s1487 + $0x60] sm:$0xff]
    %v1501 = vld [vmem:[%s1487 + $0x68] sm:$0xff]
    %v1502 = vld [vmem:[%s1487 + $0x70] sm:$0xff]
    %v1503 = vld [vmem:[%s1487 + $0x78] sm:$0xff]
    %v1504 = vld [vmem:[%s1487 + $0x80] sm:$0xff]
    %v1505 = vld [vmem:[%s1487 + $0x88] sm:$0xff]
    %v1506 = vld [vmem:[%s1487 + $0x90] sm:$0xff]
    %v1507 = vld [vmem:[%s1487 + $0x98] sm:$0xff]
    %v1508 = vld [vmem:[%s1487 + $0xa0] sm:$0xff]
    %v1509 = vld [vmem:[%s1487 + $0xa8] sm:$0xff]
    %v1510 = vld [vmem:[%s1487 + $0xb0] sm:$0xff]
    %v1511 = vld [vmem:[%s1487 + $0xb8] sm:$0xff]
    %v1512 = vld [vmem:[%s1487 + $0xc0] sm:$0xff]
    %v1513 = vld [vmem:[%s1487 + $0xc8] sm:$0xff]
    %v1514 = vld [vmem:[%s1487 + $0xd0] sm:$0xff]
    %v1515 = vld [vmem:[%s1487 + $0xd8] sm:$0xff]
    %v1516 = vld [vmem:[%s1487 + $0xe0] sm:$0xff]
    %v1517 = vld [vmem:[%s1487 + $0xe8] sm:$0xff]
    %v1518 = vld [vmem:[%s1487 + $0xf0] sm:$0xff]
    %v1519 = vld [vmem:[%s1487 + $0xf8] sm:$0xff]
    %s1520 = scalar_lea.vmem %s4, 6
    %v1521 = vld [vmem:[%s1520] sm:$0x3]
    %v1523 = vlaneseq
    %v1524 = vshrl.u32 %v1523, 7
    %v1525 = vsub.s32 0, %v1524
    %v1526 = vrot.slane %v1521, %v1525
    %v1527 = vlaneseq
    %v1528 = vshrl.u32 %v1527, 7
    %v1529 = vsub.s32 1, %v1528
    %v1530 = vrot.slane %v1521, %v1529
    %v1565 = vunpack.c.l.b16 %v1488
    %v1566 = vunpack.c.h.b16 %v1488
    %v1567 = vunpack.c.l.b16 %v1489
    %v1568 = vunpack.c.h.b16 %v1489
    %v1569 = vunpack.c.l.b16 %v1490
    %v1570 = vunpack.c.h.b16 %v1490
    %v1571 = vunpack.c.l.b16 %v1491
    %v1572 = vunpack.c.h.b16 %v1491
    %v1573 = vunpack.c.l.b16 %v1492
    %v1574 = vunpack.c.h.b16 %v1492
    %v1575 = vunpack.c.l.b16 %v1493
    %v1576 = vunpack.c.h.b16 %v1493
    %v1577 = vunpack.c.l.b16 %v1494
    %v1578 = vunpack.c.h.b16 %v1494
    %v1579 = vunpack.c.l.b16 %v1495
    %v1580 = vunpack.c.h.b16 %v1495
    %v1581 = vunpack.c.l.b16 %v1496
    %v1582 = vunpack.c.h.b16 %v1496
    %v1583 = vunpack.c.l.b16 %v1497
    %v1584 = vunpack.c.h.b16 %v1497
    %v1585 = vunpack.c.l.b16 %v1498
    %v1586 = vunpack.c.h.b16 %v1498
    %v1587 = vunpack.c.l.b16 %v1499
    %v1588 = vunpack.c.h.b16 %v1499
    %v1589 = vunpack.c.l.b16 %v1500
    %v1590 = vunpack.c.h.b16 %v1500
    %v1591 = vunpack.c.l.b16 %v1501
    %v1592 = vunpack.c.h.b16 %v1501
    %v1593 = vunpack.c.l.b16 %v1502
    %v1594 = vunpack.c.h.b16 %v1502
    %v1595 = vunpack.c.l.b16 %v1503
    %v1596 = vunpack.c.h.b16 %v1503
    %v1597 = vunpack.c.l.b16 %v1504
    %v1598 = vunpack.c.h.b16 %v1504
    %v1599 = vunpack.c.l.b16 %v1505
    %v1600 = vunpack.c.h.b16 %v1505
    %v1601 = vunpack.c.l.b16 %v1506
    %v1602 = vunpack.c.h.b16 %v1506
    %v1603 = vunpack.c.l.b16 %v1507
    %v1604 = vunpack.c.h.b16 %v1507
    %v1605 = vunpack.c.l.b16 %v1508
    %v1606 = vunpack.c.h.b16 %v1508
    %v1607 = vunpack.c.l.b16 %v1509
    %v1608 = vunpack.c.h.b16 %v1509
    %v1609 = vunpack.c.l.b16 %v1510
    %v1610 = vunpack.c.h.b16 %v1510
    %v1611 = vunpack.c.l.b16 %v1511
    %v1612 = vunpack.c.h.b16 %v1511
    %v1613 = vunpack.c.l.b16 %v1512
    %v1614 = vunpack.c.h.b16 %v1512
    %v1615 = vunpack.c.l.b16 %v1513
    %v1616 = vunpack.c.h.b16 %v1513
    %v1617 = vunpack.c.l.b16 %v1514
    %v1618 = vunpack.c.h.b16 %v1514
    %v1619 = vunpack.c.l.b16 %v1515
    %v1620 = vunpack.c.h.b16 %v1515
    %v1621 = vunpack.c.l.b16 %v1516
    %v1622 = vunpack.c.h.b16 %v1516
    %v1623 = vunpack.c.l.b16 %v1517
    %v1624 = vunpack.c.h.b16 %v1517
    %v1625 = vunpack.c.l.b16 %v1518
    %v1626 = vunpack.c.h.b16 %v1518
    %v1627 = vunpack.c.l.b16 %v1519
    %v1628 = vunpack.c.h.b16 %v1519
    %v1629 = vpack.c.b16 %v1567, %v1565
    %v1630 = vpack.c.b16 %v1568, %v1566
    %v1631 = vpack.c.b16 %v1571, %v1569
    %v1632 = vpack.c.b16 %v1572, %v1570
    %v1633 = vpack.c.b16 %v1575, %v1573
    %v1634 = vpack.c.b16 %v1576, %v1574
    %v1635 = vpack.c.b16 %v1579, %v1577
    %v1636 = vpack.c.b16 %v1580, %v1578
    %v1637 = vpack.c.b16 %v1583, %v1581
    %v1638 = vpack.c.b16 %v1584, %v1582
    %v1639 = vpack.c.b16 %v1587, %v1585
    %v1640 = vpack.c.b16 %v1588, %v1586
    %v1641 = vpack.c.b16 %v1591, %v1589
    %v1642 = vpack.c.b16 %v1592, %v1590
    %v1643 = vpack.c.b16 %v1595, %v1593
    %v1644 = vpack.c.b16 %v1596, %v1594
    %v1645 = vpack.c.b16 %v1599, %v1597
    %v1646 = vpack.c.b16 %v1600, %v1598
    %v1647 = vpack.c.b16 %v1603, %v1601
    %v1648 = vpack.c.b16 %v1604, %v1602
    %v1649 = vpack.c.b16 %v1607, %v1605
    %v1650 = vpack.c.b16 %v1608, %v1606
    %v1651 = vpack.c.b16 %v1611, %v1609
    %v1652 = vpack.c.b16 %v1612, %v1610
    %v1653 = vpack.c.b16 %v1615, %v1613
    %v1654 = vpack.c.b16 %v1616, %v1614
    %v1655 = vpack.c.b16 %v1619, %v1617
    %v1656 = vpack.c.b16 %v1620, %v1618
    %v1657 = vpack.c.b16 %v1623, %v1621
    %v1658 = vpack.c.b16 %v1624, %v1622
    %v1659 = vpack.c.b16 %v1627, %v1625
    %v1660 = vpack.c.b16 %v1628, %v1626
    %1693 = vmatprep.subr.bf16.mxu0 %v1630
    %1694 = vmatpush1.bf16.msra.mxu0 %v1629
    %1695 = vmatprep.subr.bf16.mxu0 %v1632
    %1696 = vmatpush1.bf16.msra.mxu0 %v1631
    %1697 = vmatprep.subr.bf16.mxu0 %v1634
    %1698 = vmatpush1.bf16.msra.mxu0 %v1633
    %1699 = vmatprep.subr.bf16.mxu0 %v1636
    %1700 = vmatpush1.bf16.msra.mxu0 %v1635
    %1701 = vmatprep.subr.bf16.mxu0 %v1638
    %1702 = vmatpush1.bf16.msra.mxu0 %v1637
    %1703 = vmatprep.subr.bf16.mxu0 %v1640
    %1704 = vmatpush1.bf16.msra.mxu0 %v1639
    %1705 = vmatprep.subr.bf16.mxu0 %v1642
    %1706 = vmatpush1.bf16.msra.mxu0 %v1641
    %1707 = vmatprep.subr.bf16.mxu0 %v1644
    %1708 = vmatpush1.bf16.msra.mxu0 %v1643
    %1709 = vmatprep.subr.bf16.mxu0 %v1646
    %1710 = vmatpush1.bf16.msra.mxu0 %v1645
    %1711 = vmatprep.subr.bf16.mxu0 %v1648
    %1712 = vmatpush1.bf16.msra.mxu0 %v1647
    %1713 = vmatprep.subr.bf16.mxu0 %v1650
    %1714 = vmatpush1.bf16.msra.mxu0 %v1649
    %1715 = vmatprep.subr.bf16.mxu0 %v1652
    %1716 = vmatpush1.bf16.msra.mxu0 %v1651
    %1717 = vmatprep.subr.bf16.mxu0 %v1654
    %1718 = vmatpush1.bf16.msra.mxu0 %v1653
    %1719 = vmatprep.subr.bf16.mxu0 %v1656
    %1720 = vmatpush1.bf16.msra.mxu0 %v1655
    %1721 = vmatprep.subr.bf16.mxu0 %v1658
    %1722 = vmatpush1.bf16.msra.mxu0 %v1657
    %1723 = vmatprep.subr.bf16.mxu0 %v1660
    %1724 = vmatpush1.bf16.msra.mxu0 %v1659
    %1725 = vmatprep.mubr.bf16.mxu0 %v1472
    %1726 = vmatmul.mubr.bf16.gmra.mrb[0].mxu0 %v1471
    %v1727 = vpop.f32.mrb[0].mxu0
    %v1728 = vadd.f32 %v1526, %v1727
    %v1729 = vpop.f32.mrb[0].mxu0
    %v1730 = vadd.f32 %v1530, %v1729
    %v1731 = vpop.f32.mrb[0].mxu0
    %v1732 = vadd.f32 %v1526, %v1731
    %v1733 = vpop.f32.mrb[0].mxu0
    %v1734 = vadd.f32 %v1530, %v1733
    %1735 = vmatprep.mubr.bf16.mxu0 %v1474
    %1736 = vmatmul.mubr.bf16.gmra.mrb[0].mxu0 %v1473
    %v1737 = vpop.f32.mrb[0].mxu0
    %v1738 = vadd.f32 %v1526, %v1737
    %v1739 = vpop.f32.mrb[0].mxu0
    %v1740 = vadd.f32 %v1530, %v1739
    %v1741 = vpop.f32.mrb[0].mxu0
    %v1742 = vadd.f32 %v1526, %v1741
    %v1743 = vpop.f32.mrb[0].mxu0
    %v1744 = vadd.f32 %v1530, %v1743
    %1745 = vmatprep.mubr.bf16.mxu0 %v1476
    %1746 = vmatmul.mubr.bf16.gmra.mrb[0].mxu0 %v1475
    %v1747 = vpop.f32.mrb[0].mxu0
    %v1748 = vadd.f32 %v1526, %v1747
    %v1749 = vpop.f32.mrb[0].mxu0
    %v1750 = vadd.f32 %v1530, %v1749
    %v1751 = vpop.f32.mrb[0].mxu0
    %v1752 = vadd.f32 %v1526, %v1751
    %v1753 = vpop.f32.mrb[0].mxu0
    %v1754 = vadd.f32 %v1530, %v1753
    %1755 = vmatprep.mubr.bf16.mxu0 %v1478
    %1756 = vmatmul.mubr.bf16.gmra.mrb[0].mxu0 %v1477
    %v1757 = vpop.f32.mrb[0].mxu0
    %v1758 = vadd.f32 %v1526, %v1757
    %v1759 = vpop.f32.mrb[0].mxu0
    %v1760 = vadd.f32 %v1530, %v1759
    %v1761 = vpop.f32.mrb[0].mxu0
    %v1762 = vadd.f32 %v1526, %v1761
    %v1763 = vpop.f32.mrb[0].mxu0
    %v1764 = vadd.f32 %v1530, %v1763
    %1765 = vmatprep.mubr.bf16.mxu0 %v1480
    %1766 = vmatmul.mubr.bf16.gmra.mrb[0].mxu0 %v1479
    %v1767 = vpop.f32.mrb[0].mxu0
    %v1768 = vadd.f32 %v1526, %v1767
    %v1769 = vpop.f32.mrb[0].mxu0
    %v1770 = vadd.f32 %v1530, %v1769
    %v1771 = vpop.f32.mrb[0].mxu0
    %v1772 = vadd.f32 %v1526, %v1771
    %v1773 = vpop.f32.mrb[0].mxu0
    %v1774 = vadd.f32 %v1530, %v1773
    %1775 = vmatprep.mubr.bf16.mxu0 %v1482
    %1776 = vmatmul.mubr.bf16.gmra.mrb[0].mxu0 %v1481
    %v1777 = vpop.f32.mrb[0].mxu0
    %v1778 = vadd.f32 %v1526, %v1777
    %v1779 = vpop.f32.mrb[0].mxu0
    %v1780 = vadd.f32 %v1530, %v1779
    %v1781 = vpop.f32.mrb[0].mxu0
    %v1782 = vadd.f32 %v1526, %v1781
    %v1783 = vpop.f32.mrb[0].mxu0
    %v1784 = vadd.f32 %v1530, %v1783
    %1785 = vmatprep.mubr.bf16.mxu0 %v1484
    %1786 = vmatmul.mubr.bf16.gmra.mrb[0].mxu0 %v1483
    %v1787 = vpop.f32.mrb[0].mxu0
    %v1788 = vadd.f32 %v1526, %v1787
    %v1789 = vpop.f32.mrb[0].mxu0
    %v1790 = vadd.f32 %v1530, %v1789
    %v1791 = vpop.f32.mrb[0].mxu0
    %v1792 = vadd.f32 %v1526, %v1791
    %v1793 = vpop.f32.mrb[0].mxu0
    %v1794 = vadd.f32 %v1530, %v1793
    %1795 = vmatprep.mubr.bf16.mxu0 %v1486
    %1796 = vmatmul.mubr.bf16.gmra.mrb[0].mxu0 %v1485
    %v1797 = vpop.f32.mrb[0].mxu0
    %v1798 = vadd.f32 %v1526, %v1797
    %v1799 = vpop.f32.mrb[0].mxu0
    %v1800 = vadd.f32 %v1530, %v1799
    %v1801 = vpop.f32.mrb[0].mxu0
    %v1802 = vadd.f32 %v1526, %v1801
    %v1803 = vpop.f32.mrb[0].mxu0
    %v1804 = vadd.f32 %v1530, %v1803
    %1805 = vdwg.mxu0
    %v1806 = vmax.f32 %v1728, 0.0
    %v1807 = vmax.f32 %v1730, 0.0
    %v1808 = vmax.f32 %v1732, 0.0
    %v1809 = vmax.f32 %v1734, 0.0
    %v1810 = vmax.f32 %v1738, 0.0
    %v1811 = vmax.f32 %v1740, 0.0
    %v1812 = vmax.f32 %v1742, 0.0
    %v1813 = vmax.f32 %v1744, 0.0
    %v1814 = vmax.f32 %v1748, 0.0
    %v1815 = vmax.f32 %v1750, 0.0
    %v1816 = vmax.f32 %v1752, 0.0
    %v1817 = vmax.f32 %v1754, 0.0
    %v1818 = vmax.f32 %v1758, 0.0
    %v1819 = vmax.f32 %v1760, 0.0
    %v1820 = vmax.f32 %v1762, 0.0
    %v1821 = vmax.f32 %v1764, 0.0
    %v1822 = vmax.f32 %v1768, 0.0
    %v1823 = vmax.f32 %v1770, 0.0
    %v1824 = vmax.f32 %v1772, 0.0
    %v1825 = vmax.f32 %v1774, 0.0
    %v1826 = vmax.f32 %v1778, 0.0
    %v1827 = vmax.f32 %v1780, 0.0
    %v1828 = vmax.f32 %v1782, 0.0
    %v1829 = vmax.f32 %v1784, 0.0
    %v1830 = vmax.f32 %v1788, 0.0
    %v1831 = vmax.f32 %v1790, 0.0
    %v1832 = vmax.f32 %v1792, 0.0
    %v1833 = vmax.f32 %v1794, 0.0
    %v1834 = vmax.f32 %v1798, 0.0
    %v1835 = vmax.f32 %v1800, 0.0
    %v1836 = vmax.f32 %v1802, 0.0
    %v1837 = vmax.f32 %v1804, 0.0
    %v1838 = vpack.c.bf16 %v1808, %v1806
    %v1839 = vpack.c.bf16 %v1809, %v1807
    %v1840 = vpack.c.bf16 %v1812, %v1810
    %v1841 = vpack.c.bf16 %v1813, %v1811
    %v1842 = vpack.c.bf16 %v1816, %v1814
    %v1843 = vpack.c.bf16 %v1817, %v1815
    %v1844 = vpack.c.bf16 %v1820, %v1818
    %v1845 = vpack.c.bf16 %v1821, %v1819
    %v1846 = vpack.c.bf16 %v1824, %v1822
    %v1847 = vpack.c.bf16 %v1825, %v1823
    %v1848 = vpack.c.bf16 %v1828, %v1826
    %v1849 = vpack.c.bf16 %v1829, %v1827
    %v1850 = vpack.c.bf16 %v1832, %v1830
    %v1851 = vpack.c.bf16 %v1833, %v1831
    %v1852 = vpack.c.bf16 %v1836, %v1834
    %v1853 = vpack.c.bf16 %v1837, %v1835
    %s1854 = scalar_lea.vmem [#allocation2], 1024
    %v1855 = vld [vmem:[%s1854] sm:$0xff]
    %v1856 = vld [vmem:[%s1854 + $0x8] sm:$0xff]
    %v1857 = vld [vmem:[%s1854 + $0x10] sm:$0xff]
    %v1858 = vld [vmem:[%s1854 + $0x18] sm:$0xff]
    %v1859 = vld [vmem:[%s1854 + $0x20] sm:$0xff]
    %v1860 = vld [vmem:[%s1854 + $0x28] sm:$0xff]
    %v1861 = vld [vmem:[%s1854 + $0x30] sm:$0xff]
    %v1862 = vld [vmem:[%s1854 + $0x38] sm:$0xff]
    %v1863 = vld [vmem:[%s1854 + $0x40] sm:$0xff]
    %v1864 = vld [vmem:[%s1854 + $0x48] sm:$0xff]
    %v1865 = vld [vmem:[%s1854 + $0x50] sm:$0xff]
    %v1866 = vld [vmem:[%s1854 + $0x58] sm:$0xff]
    %v1867 = vld [vmem:[%s1854 + $0x60] sm:$0xff]
    %v1868 = vld [vmem:[%s1854 + $0x68] sm:$0xff]
    %v1869 = vld [vmem:[%s1854 + $0x70] sm:$0xff]
    %v1870 = vld [vmem:[%s1854 + $0x78] sm:$0xff]
    %v1871 = vld [vmem:[%s1854 + $0x80] sm:$0xff]
    %v1872 = vld [vmem:[%s1854 + $0x88] sm:$0xff]
    %v1873 = vld [vmem:[%s1854 + $0x90] sm:$0xff]
    %v1874 = vld [vmem:[%s1854 + $0x98] sm:$0xff]
    %v1875 = vld [vmem:[%s1854 + $0xa0] sm:$0xff]
    %v1876 = vld [vmem:[%s1854 + $0xa8] sm:$0xff]
    %v1877 = vld [vmem:[%s1854 + $0xb0] sm:$0xff]
    %v1878 = vld [vmem:[%s1854 + $0xb8] sm:$0xff]
    %v1879 = vld [vmem:[%s1854 + $0xc0] sm:$0xff]
    %v1880 = vld [vmem:[%s1854 + $0xc8] sm:$0xff]
    %v1881 = vld [vmem:[%s1854 + $0xd0] sm:$0xff]
    %v1882 = vld [vmem:[%s1854 + $0xd8] sm:$0xff]
    %v1883 = vld [vmem:[%s1854 + $0xe0] sm:$0xff]
    %v1884 = vld [vmem:[%s1854 + $0xe8] sm:$0xff]
    %v1885 = vld [vmem:[%s1854 + $0xf0] sm:$0xff]
    %v1886 = vld [vmem:[%s1854 + $0xf8] sm:$0xff]
    %s1887 = scalar_lea.vmem %s4, 8
    %v1888 = vld [vmem:[%s1887] sm:$0x3]
    %v1890 = vlaneseq
    %v1891 = vshrl.u32 %v1890, 7
    %v1892 = vsub.s32 0, %v1891
    %v1893 = vrot.slane %v1888, %v1892
    %v1894 = vlaneseq
    %v1895 = vshrl.u32 %v1894, 7
    %v1896 = vsub.s32 1, %v1895
    %v1897 = vrot.slane %v1888, %v1896
    %v1932 = vunpack.c.l.b16 %v1855
    %v1933 = vunpack.c.h.b16 %v1855
    %v1934 = vunpack.c.l.b16 %v1856
    %v1935 = vunpack.c.h.b16 %v1856
    %v1936 = vunpack.c.l.b16 %v1857
    %v1937 = vunpack.c.h.b16 %v1857
    %v1938 = vunpack.c.l.b16 %v1858
    %v1939 = vunpack.c.h.b16 %v1858
    %v1940 = vunpack.c.l.b16 %v1859
    %v1941 = vunpack.c.h.b16 %v1859
    %v1942 = vunpack.c.l.b16 %v1860
    %v1943 = vunpack.c.h.b16 %v1860
    %v1944 = vunpack.c.l.b16 %v1861
    %v1945 = vunpack.c.h.b16 %v1861
    %v1946 = vunpack.c.l.b16 %v1862
    %v1947 = vunpack.c.h.b16 %v1862
    %v1948 = vunpack.c.l.b16 %v1863
    %v1949 = vunpack.c.h.b16 %v1863
    %v1950 = vunpack.c.l.b16 %v1864
    %v1951 = vunpack.c.h.b16 %v1864
    %v1952 = vunpack.c.l.b16 %v1865
    %v1953 = vunpack.c.h.b16 %v1865
    %v1954 = vunpack.c.l.b16 %v1866
    %v1955 = vunpack.c.h.b16 %v1866
    %v1956 = vunpack.c.l.b16 %v1867
    %v1957 = vunpack.c.h.b16 %v1867
    %v1958 = vunpack.c.l.b16 %v1868
    %v1959 = vunpack.c.h.b16 %v1868
    %v1960 = vunpack.c.l.b16 %v1869
    %v1961 = vunpack.c.h.b16 %v1869
    %v1962 = vunpack.c.l.b16 %v1870
    %v1963 = vunpack.c.h.b16 %v1870
    %v1964 = vunpack.c.l.b16 %v1871
    %v1965 = vunpack.c.h.b16 %v1871
    %v1966 = vunpack.c.l.b16 %v1872
    %v1967 = vunpack.c.h.b16 %v1872
    %v1968 = vunpack.c.l.b16 %v1873
    %v1969 = vunpack.c.h.b16 %v1873
    %v1970 = vunpack.c.l.b16 %v1874
    %v1971 = vunpack.c.h.b16 %v1874
    %v1972 = vunpack.c.l.b16 %v1875
    %v1973 = vunpack.c.h.b16 %v1875
    %v1974 = vunpack.c.l.b16 %v1876
    %v1975 = vunpack.c.h.b16 %v1876
    %v1976 = vunpack.c.l.b16 %v1877
    %v1977 = vunpack.c.h.b16 %v1877
    %v1978 = vunpack.c.l.b16 %v1878
    %v1979 = vunpack.c.h.b16 %v1878
    %v1980 = vunpack.c.l.b16 %v1879
    %v1981 = vunpack.c.h.b16 %v1879
    %v1982 = vunpack.c.l.b16 %v1880
    %v1983 = vunpack.c.h.b16 %v1880
    %v1984 = vunpack.c.l.b16 %v1881
    %v1985 = vunpack.c.h.b16 %v1881
    %v1986 = vunpack.c.l.b16 %v1882
    %v1987 = vunpack.c.h.b16 %v1882
    %v1988 = vunpack.c.l.b16 %v1883
    %v1989 = vunpack.c.h.b16 %v1883
    %v1990 = vunpack.c.l.b16 %v1884
    %v1991 = vunpack.c.h.b16 %v1884
    %v1992 = vunpack.c.l.b16 %v1885
    %v1993 = vunpack.c.h.b16 %v1885
    %v1994 = vunpack.c.l.b16 %v1886
    %v1995 = vunpack.c.h.b16 %v1886
    %v1996 = vpack.c.b16 %v1934, %v1932
    %v1997 = vpack.c.b16 %v1935, %v1933
    %v1998 = vpack.c.b16 %v1938, %v1936
    %v1999 = vpack.c.b16 %v1939, %v1937
    %v2000 = vpack.c.b16 %v1942, %v1940
    %v2001 = vpack.c.b16 %v1943, %v1941
    %v2002 = vpack.c.b16 %v1946, %v1944
    %v2003 = vpack.c.b16 %v1947, %v1945
    %v2004 = vpack.c.b16 %v1950, %v1948
    %v2005 = vpack.c.b16 %v1951, %v1949
    %v2006 = vpack.c.b16 %v1954, %v1952
    %v2007 = vpack.c.b16 %v1955, %v1953
    %v2008 = vpack.c.b16 %v1958, %v1956
    %v2009 = vpack.c.b16 %v1959, %v1957
    %v2010 = vpack.c.b16 %v1962, %v1960
    %v2011 = vpack.c.b16 %v1963, %v1961
    %v2012 = vpack.c.b16 %v1966, %v1964
    %v2013 = vpack.c.b16 %v1967, %v1965
    %v2014 = vpack.c.b16 %v1970, %v1968
    %v2015 = vpack.c.b16 %v1971, %v1969
    %v2016 = vpack.c.b16 %v1974, %v1972
    %v2017 = vpack.c.b16 %v1975, %v1973
    %v2018 = vpack.c.b16 %v1978, %v1976
    %v2019 = vpack.c.b16 %v1979, %v1977
    %v2020 = vpack.c.b16 %v1982, %v1980
    %v2021 = vpack.c.b16 %v1983, %v1981
    %v2022 = vpack.c.b16 %v1986, %v1984
    %v2023 = vpack.c.b16 %v1987, %v1985
    %v2024 = vpack.c.b16 %v1990, %v1988
    %v2025 = vpack.c.b16 %v1991, %v1989
    %v2026 = vpack.c.b16 %v1994, %v1992
    %v2027 = vpack.c.b16 %v1995, %v1993
    %2060 = vmatprep.subr.bf16.mxu0 %v1997
    %2061 = vmatpush1.bf16.msra.mxu0 %v1996
    %2062 = vmatprep.subr.bf16.mxu0 %v1999
    %2063 = vmatpush1.bf16.msra.mxu0 %v1998
    %2064 = vmatprep.subr.bf16.mxu0 %v2001
    %2065 = vmatpush1.bf16.msra.mxu0 %v2000
    %2066 = vmatprep.subr.bf16.mxu0 %v2003
    %2067 = vmatpush1.bf16.msra.mxu0 %v2002
    %2068 = vmatprep.subr.bf16.mxu0 %v2005
    %2069 = vmatpush1.bf16.msra.mxu0 %v2004
    %2070 = vmatprep.subr.bf16.mxu0 %v2007
    %2071 = vmatpush1.bf16.msra.mxu0 %v2006
    %2072 = vmatprep.subr.bf16.mxu0 %v2009
    %2073 = vmatpush1.bf16.msra.mxu0 %v2008
    %2074 = vmatprep.subr.bf16.mxu0 %v2011
    %2075 = vmatpush1.bf16.msra.mxu0 %v2010
    %2076 = vmatprep.subr.bf16.mxu0 %v2013
    %2077 = vmatpush1.bf16.msra.mxu0 %v2012
    %2078 = vmatprep.subr.bf16.mxu0 %v2015
    %2079 = vmatpush1.bf16.msra.mxu0 %v2014
    %2080 = vmatprep.subr.bf16.mxu0 %v2017
    %2081 = vmatpush1.bf16.msra.mxu0 %v2016
    %2082 = vmatprep.subr.bf16.mxu0 %v2019
    %2083 = vmatpush1.bf16.msra.mxu0 %v2018
    %2084 = vmatprep.subr.bf16.mxu0 %v2021
    %2085 = vmatpush1.bf16.msra.mxu0 %v2020
    %2086 = vmatprep.subr.bf16.mxu0 %v2023
    %2087 = vmatpush1.bf16.msra.mxu0 %v2022
    %2088 = vmatprep.subr.bf16.mxu0 %v2025
    %2089 = vmatpush1.bf16.msra.mxu0 %v2024
    %2090 = vmatprep.subr.bf16.mxu0 %v2027
    %2091 = vmatpush1.bf16.msra.mxu0 %v2026
    %2092 = vmatprep.mubr.bf16.mxu0 %v1839
    %2093 = vmatmul.mubr.bf16.gmra.mrb[0].mxu0 %v1838
    %v2094 = vpop.f32.mrb[0].mxu0
    %v2095 = vadd.f32 %v1893, %v2094
    %v2096 = vpop.f32.mrb[0].mxu0
    %v2097 = vadd.f32 %v1897, %v2096
    %v2098 = vpop.f32.mrb[0].mxu0
    %v2099 = vadd.f32 %v1893, %v2098
    %v2100 = vpop.f32.mrb[0].mxu0
    %v2101 = vadd.f32 %v1897, %v2100
    %2102 = vmatprep.mubr.bf16.mxu0 %v1841
    %2103 = vmatmul.mubr.bf16.gmra.mrb[0].mxu0 %v1840
    %v2104 = vpop.f32.mrb[0].mxu0
    %v2105 = vadd.f32 %v1893, %v2104
    %v2106 = vpop.f32.mrb[0].mxu0
    %v2107 = vadd.f32 %v1897, %v2106
    %v2108 = vpop.f32.mrb[0].mxu0
    %v2109 = vadd.f32 %v1893, %v2108
    %v2110 = vpop.f32.mrb[0].mxu0
    %v2111 = vadd.f32 %v1897, %v2110
    %2112 = vmatprep.mubr.bf16.mxu0 %v1843
    %2113 = vmatmul.mubr.bf16.gmra.mrb[0].mxu0 %v1842
    %v2114 = vpop.f32.mrb[0].mxu0
    %v2115 = vadd.f32 %v1893, %v2114
    %v2116 = vpop.f32.mrb[0].mxu0
    %v2117 = vadd.f32 %v1897, %v2116
    %v2118 = vpop.f32.mrb[0].mxu0
    %v2119 = vadd.f32 %v1893, %v2118
    %v2120 = vpop.f32.mrb[0].mxu0
    %v2121 = vadd.f32 %v1897, %v2120
    %2122 = vmatprep.mubr.bf16.mxu0 %v1845
    %2123 = vmatmul.mubr.bf16.gmra.mrb[0].mxu0 %v1844
    %v2124 = vpop.f32.mrb[0].mxu0
    %v2125 = vadd.f32 %v1893, %v2124
    %v2126 = vpop.f32.mrb[0].mxu0
    %v2127 = vadd.f32 %v1897, %v2126
    %v2128 = vpop.f32.mrb[0].mxu0
    %v2129 = vadd.f32 %v1893, %v2128
    %v2130 = vpop.f32.mrb[0].mxu0
    %v2131 = vadd.f32 %v1897, %v2130
    %2132 = vmatprep.mubr.bf16.mxu0 %v1847
    %2133 = vmatmul.mubr.bf16.gmra.mrb[0].mxu0 %v1846
    %v2134 = vpop.f32.mrb[0].mxu0
    %v2135 = vadd.f32 %v1893, %v2134
    %v2136 = vpop.f32.mrb[0].mxu0
    %v2137 = vadd.f32 %v1897, %v2136
    %v2138 = vpop.f32.mrb[0].mxu0
    %v2139 = vadd.f32 %v1893, %v2138
    %v2140 = vpop.f32.mrb[0].mxu0
    %v2141 = vadd.f32 %v1897, %v2140
    %2142 = vmatprep.mubr.bf16.mxu0 %v1849
    %2143 = vmatmul.mubr.bf16.gmra.mrb[0].mxu0 %v1848
    %v2144 = vpop.f32.mrb[0].mxu0
    %v2145 = vadd.f32 %v1893, %v2144
    %v2146 = vpop.f32.mrb[0].mxu0
    %v2147 = vadd.f32 %v1897, %v2146
    %v2148 = vpop.f32.mrb[0].mxu0
    %v2149 = vadd.f32 %v1893, %v2148
    %v2150 = vpop.f32.mrb[0].mxu0
    %v2151 = vadd.f32 %v1897, %v2150
    %2152 = vmatprep.mubr.bf16.mxu0 %v1851
    %2153 = vmatmul.mubr.bf16.gmra.mrb[0].mxu0 %v1850
    %v2154 = vpop.f32.mrb[0].mxu0
    %v2155 = vadd.f32 %v1893, %v2154
    %v2156 = vpop.f32.mrb[0].mxu0
    %v2157 = vadd.f32 %v1897, %v2156
    %v2158 = vpop.f32.mrb[0].mxu0
    %v2159 = vadd.f32 %v1893, %v2158
    %v2160 = vpop.f32.mrb[0].mxu0
    %v2161 = vadd.f32 %v1897, %v2160
    %2162 = vmatprep.mubr.bf16.mxu0 %v1853
    %2163 = vmatmul.mubr.bf16.gmra.mrb[0].mxu0 %v1852
    %v2164 = vpop.f32.mrb[0].mxu0
    %v2165 = vadd.f32 %v1893, %v2164
    %v2166 = vpop.f32.mrb[0].mxu0
    %v2167 = vadd.f32 %v1897, %v2166
    %v2168 = vpop.f32.mrb[0].mxu0
    %v2169 = vadd.f32 %v1893, %v2168
    %v2170 = vpop.f32.mrb[0].mxu0
    %v2171 = vadd.f32 %v1897, %v2170
    %2172 = vdwg.mxu0
    %v2173 = vmax.f32 %v2095, 0.0
    %v2174 = vmax.f32 %v2097, 0.0
    %v2175 = vmax.f32 %v2099, 0.0
    %v2176 = vmax.f32 %v2101, 0.0
    %v2177 = vmax.f32 %v2105, 0.0
    %v2178 = vmax.f32 %v2107, 0.0
    %v2179 = vmax.f32 %v2109, 0.0
    %v2180 = vmax.f32 %v2111, 0.0
    %v2181 = vmax.f32 %v2115, 0.0
    %v2182 = vmax.f32 %v2117, 0.0
    %v2183 = vmax.f32 %v2119, 0.0
    %v2184 = vmax.f32 %v2121, 0.0
    %v2185 = vmax.f32 %v2125, 0.0
    %v2186 = vmax.f32 %v2127, 0.0
    %v2187 = vmax.f32 %v2129, 0.0
    %v2188 = vmax.f32 %v2131, 0.0
    %v2189 = vmax.f32 %v2135, 0.0
    %v2190 = vmax.f32 %v2137, 0.0
    %v2191 = vmax.f32 %v2139, 0.0
    %v2192 = vmax.f32 %v2141, 0.0
    %v2193 = vmax.f32 %v2145, 0.0
    %v2194 = vmax.f32 %v2147, 0.0
    %v2195 = vmax.f32 %v2149, 0.0
    %v2196 = vmax.f32 %v2151, 0.0
    %v2197 = vmax.f32 %v2155, 0.0
    %v2198 = vmax.f32 %v2157, 0.0
    %v2199 = vmax.f32 %v2159, 0.0
    %v2200 = vmax.f32 %v2161, 0.0
    %v2201 = vmax.f32 %v2165, 0.0
    %v2202 = vmax.f32 %v2167, 0.0
    %v2203 = vmax.f32 %v2169, 0.0
    %v2204 = vmax.f32 %v2171, 0.0
    %v2205 = vpack.c.bf16 %v2175, %v2173
    %v2206 = vpack.c.bf16 %v2176, %v2174
    %v2207 = vpack.c.bf16 %v2179, %v2177
    %v2208 = vpack.c.bf16 %v2180, %v2178
    %v2209 = vpack.c.bf16 %v2183, %v2181
    %v2210 = vpack.c.bf16 %v2184, %v2182
    %v2211 = vpack.c.bf16 %v2187, %v2185
    %v2212 = vpack.c.bf16 %v2188, %v2186
    %v2213 = vpack.c.bf16 %v2191, %v2189
    %v2214 = vpack.c.bf16 %v2192, %v2190
    %v2215 = vpack.c.bf16 %v2195, %v2193
    %v2216 = vpack.c.bf16 %v2196, %v2194
    %v2217 = vpack.c.bf16 %v2199, %v2197
    %v2218 = vpack.c.bf16 %v2200, %v2198
    %v2219 = vpack.c.bf16 %v2203, %v2201
    %v2220 = vpack.c.bf16 %v2204, %v2202
    %v2221 = vld [vmem:[#allocation4] sm:$0xf]
    %v2222 = vld [vmem:[#allocation4 + $0x4] sm:$0xf]
    %v2223 = vld [vmem:[#allocation4 + $0x8] sm:$0xf]
    %v2224 = vld [vmem:[#allocation4 + $0xc] sm:$0xf]
    %v2225 = vld [vmem:[#allocation4 + $0x10] sm:$0xf]
    %v2226 = vld [vmem:[#allocation4 + $0x14] sm:$0xf]
    %v2227 = vld [vmem:[#allocation4 + $0x18] sm:$0xf]
    %v2228 = vld [vmem:[#allocation4 + $0x1c] sm:$0xf]
    %v2229 = vld [vmem:[#allocation4 + $0x20] sm:$0xf]
    %v2230 = vld [vmem:[#allocation4 + $0x24] sm:$0xf]
    %v2231 = vld [vmem:[#allocation4 + $0x28] sm:$0xf]
    %v2232 = vld [vmem:[#allocation4 + $0x2c] sm:$0xf]
    %v2233 = vld [vmem:[#allocation4 + $0x30] sm:$0xf]
    %v2234 = vld [vmem:[#allocation4 + $0x34] sm:$0xf]
    %v2235 = vld [vmem:[#allocation4 + $0x38] sm:$0xf]
    %v2236 = vld [vmem:[#allocation4 + $0x3c] sm:$0xf]
    %v2237 = vld [vmem:[#allocation4 + $0x40] sm:$0xf]
    %v2238 = vld [vmem:[#allocation4 + $0x44] sm:$0xf]
    %v2239 = vld [vmem:[#allocation4 + $0x48] sm:$0xf]
    %v2240 = vld [vmem:[#allocation4 + $0x4c] sm:$0xf]
    %v2241 = vld [vmem:[#allocation4 + $0x50] sm:$0xf]
    %v2242 = vld [vmem:[#allocation4 + $0x54] sm:$0xf]
    %v2243 = vld [vmem:[#allocation4 + $0x58] sm:$0xf]
    %v2244 = vld [vmem:[#allocation4 + $0x5c] sm:$0xf]
    %v2245 = vld [vmem:[#allocation4 + $0x60] sm:$0xf]
    %v2246 = vld [vmem:[#allocation4 + $0x64] sm:$0xf]
    %v2247 = vld [vmem:[#allocation4 + $0x68] sm:$0xf]
    %v2248 = vld [vmem:[#allocation4 + $0x6c] sm:$0xf]
    %v2249 = vld [vmem:[#allocation4 + $0x70] sm:$0xf]
    %v2250 = vld [vmem:[#allocation4 + $0x74] sm:$0xf]
    %v2251 = vld [vmem:[#allocation4 + $0x78] sm:$0xf]
    %v2252 = vld [vmem:[#allocation4 + $0x7c] sm:$0xf]
    %v2253 = vld [vmem:[%s6] sm:$0x1]
    %v2255 = vlaneseq
    %v2256 = vshrl.u32 %v2255, 7
    %v2257 = vsub.s32 0, %v2256
    %v2258 = vrot.slane %v2253, %v2257
    %v2292 = vunpack.c.l.b16 %v2221
    %v2293 = vunpack.c.l.b16 %v2222
    %v2294 = vunpack.c.l.b16 %v2223
    %v2295 = vunpack.c.l.b16 %v2224
    %v2296 = vunpack.c.l.b16 %v2225
    %v2297 = vunpack.c.l.b16 %v2226
    %v2298 = vunpack.c.l.b16 %v2227
    %v2299 = vunpack.c.l.b16 %v2228
    %v2300 = vunpack.c.l.b16 %v2229
    %v2301 = vunpack.c.l.b16 %v2230
    %v2302 = vunpack.c.l.b16 %v2231
    %v2303 = vunpack.c.l.b16 %v2232
    %v2304 = vunpack.c.l.b16 %v2233
    %v2305 = vunpack.c.l.b16 %v2234
    %v2306 = vunpack.c.l.b16 %v2235
    %v2307 = vunpack.c.l.b16 %v2236
    %v2308 = vunpack.c.l.b16 %v2237
    %v2309 = vunpack.c.l.b16 %v2238
    %v2310 = vunpack.c.l.b16 %v2239
    %v2311 = vunpack.c.l.b16 %v2240
    %v2312 = vunpack.c.l.b16 %v2241
    %v2313 = vunpack.c.l.b16 %v2242
    %v2314 = vunpack.c.l.b16 %v2243
    %v2315 = vunpack.c.l.b16 %v2244
    %v2316 = vunpack.c.l.b16 %v2245
    %v2317 = vunpack.c.l.b16 %v2246
    %v2318 = vunpack.c.l.b16 %v2247
    %v2319 = vunpack.c.l.b16 %v2248
    %v2320 = vunpack.c.l.b16 %v2249
    %v2321 = vunpack.c.l.b16 %v2250
    %v2322 = vunpack.c.l.b16 %v2251
    %v2323 = vunpack.c.l.b16 %v2252
    %v2324 = vpack.c.b16 %v2293, %v2292
    %v2325 = vpack.c.b16 %v2295, %v2294
    %v2326 = vpack.c.b16 %v2297, %v2296
    %v2327 = vpack.c.b16 %v2299, %v2298
    %v2328 = vpack.c.b16 %v2301, %v2300
    %v2329 = vpack.c.b16 %v2303, %v2302
    %v2330 = vpack.c.b16 %v2305, %v2304
    %v2331 = vpack.c.b16 %v2307, %v2306
    %v2332 = vpack.c.b16 %v2309, %v2308
    %v2333 = vpack.c.b16 %v2311, %v2310
    %v2334 = vpack.c.b16 %v2313, %v2312
    %v2335 = vpack.c.b16 %v2315, %v2314
    %v2336 = vpack.c.b16 %v2317, %v2316
    %v2337 = vpack.c.b16 %v2319, %v2318
    %v2338 = vpack.c.b16 %v2321, %v2320
    %v2339 = vpack.c.b16 %v2323, %v2322
    %2356 = vmatprep.subr.bf16.mxu0 0
    %2357 = vmatpush1.bf16.msra.mxu0 %v2324
    %2358 = vmatprep.subr.bf16.mxu0 0
    %2359 = vmatpush1.bf16.msra.mxu0 %v2325
    %2360 = vmatprep.subr.bf16.mxu0 0
    %2361 = vmatpush1.bf16.msra.mxu0 %v2326
    %2362 = vmatprep.subr.bf16.mxu0 0
    %2363 = vmatpush1.bf16.msra.mxu0 %v2327
    %2364 = vmatprep.subr.bf16.mxu0 0
    %2365 = vmatpush1.bf16.msra.mxu0 %v2328
    %2366 = vmatprep.subr.bf16.mxu0 0
    %2367 = vmatpush1.bf16.msra.mxu0 %v2329
    %2368 = vmatprep.subr.bf16.mxu0 0
    %2369 = vmatpush1.bf16.msra.mxu0 %v2330
    %2370 = vmatprep.subr.bf16.mxu0 0
    %2371 = vmatpush1.bf16.msra.mxu0 %v2331
    %2372 = vmatprep.subr.bf16.mxu0 0
    %2373 = vmatpush1.bf16.msra.mxu0 %v2332
    %2374 = vmatprep.subr.bf16.mxu0 0
    %2375 = vmatpush1.bf16.msra.mxu0 %v2333
    %2376 = vmatprep.subr.bf16.mxu0 0
    %2377 = vmatpush1.bf16.msra.mxu0 %v2334
    %2378 = vmatprep.subr.bf16.mxu0 0
    %2379 = vmatpush1.bf16.msra.mxu0 %v2335
    %2380 = vmatprep.subr.bf16.mxu0 0
    %2381 = vmatpush1.bf16.msra.mxu0 %v2336
    %2382 = vmatprep.subr.bf16.mxu0 0
    %2383 = vmatpush1.bf16.msra.mxu0 %v2337
    %2384 = vmatprep.subr.bf16.mxu0 0
    %2385 = vmatpush1.bf16.msra.mxu0 %v2338
    %2386 = vmatprep.subr.bf16.mxu0 0
    %2387 = vmatpush1.bf16.msra.mxu0 %v2339
    %2388 = vmatprep.mubr.bf16.mxu0 %v2206
    %2389 = vmatmul.mubr.bf16.gmra.mrb[0].mxu0 %v2205
    %v2390 = vpop.f32.mrb[0].mxu0
    %v2391 = vadd.f32 %v2258, %v2390
    %v2392 = vpop.f32.mrb[0].mxu0
    %v2393 = vpop.f32.mrb[0].mxu0
    %v2394 = vadd.f32 %v2258, %v2393
    %v2395 = vpop.f32.mrb[0].mxu0
    %2396 = vmatprep.mubr.bf16.mxu0 %v2208
    %2397 = vmatmul.mubr.bf16.gmra.mrb[0].mxu0 %v2207
    %v2398 = vpop.f32.mrb[0].mxu0
    %v2399 = vadd.f32 %v2258, %v2398
    %v2400 = vpop.f32.mrb[0].mxu0
    %v2401 = vpop.f32.mrb[0].mxu0
    %v2402 = vadd.f32 %v2258, %v2401
    %v2403 = vpop.f32.mrb[0].mxu0
    %2404 = vmatprep.mubr.bf16.mxu0 %v2210
    %2405 = vmatmul.mubr.bf16.gmra.mrb[0].mxu0 %v2209
    %v2406 = vpop.f32.mrb[0].mxu0
    %v2407 = vadd.f32 %v2258, %v2406
    %v2408 = vpop.f32.mrb[0].mxu0
    %v2409 = vpop.f32.mrb[0].mxu0
    %v2410 = vadd.f32 %v2258, %v2409
    %v2411 = vpop.f32.mrb[0].mxu0
    %2412 = vmatprep.mubr.bf16.mxu0 %v2212
    %2413 = vmatmul.mubr.bf16.gmra.mrb[0].mxu0 %v2211
    %v2414 = vpop.f32.mrb[0].mxu0
    %v2415 = vadd.f32 %v2258, %v2414
    %v2416 = vpop.f32.mrb[0].mxu0
    %v2417 = vpop.f32.mrb[0].mxu0
    %v2418 = vadd.f32 %v2258, %v2417
    %v2419 = vpop.f32.mrb[0].mxu0
    %2420 = vmatprep.mubr.bf16.mxu0 %v2214
    %2421 = vmatmul.mubr.bf16.gmra.mrb[0].mxu0 %v2213
    %v2422 = vpop.f32.mrb[0].mxu0
    %v2423 = vadd.f32 %v2258, %v2422
    %v2424 = vpop.f32.mrb[0].mxu0
    %v2425 = vpop.f32.mrb[0].mxu0
    %v2426 = vadd.f32 %v2258, %v2425
    %v2427 = vpop.f32.mrb[0].mxu0
    %2428 = vmatprep.mubr.bf16.mxu0 %v2216
    %2429 = vmatmul.mubr.bf16.gmra.mrb[0].mxu0 %v2215
    %v2430 = vpop.f32.mrb[0].mxu0
    %v2431 = vadd.f32 %v2258, %v2430
    %v2432 = vpop.f32.mrb[0].mxu0
    %v2433 = vpop.f32.mrb[0].mxu0
    %v2434 = vadd.f32 %v2258, %v2433
    %v2435 = vpop.f32.mrb[0].mxu0
    %2436 = vmatprep.mubr.bf16.mxu0 %v2218
    %2437 = vmatmul.mubr.bf16.gmra.mrb[0].mxu0 %v2217
    %v2438 = vpop.f32.mrb[0].mxu0
    %v2439 = vadd.f32 %v2258, %v2438
    %v2440 = vpop.f32.mrb[0].mxu0
    %v2441 = vpop.f32.mrb[0].mxu0
    %v2442 = vadd.f32 %v2258, %v2441
    %v2443 = vpop.f32.mrb[0].mxu0
    %2444 = vmatprep.mubr.bf16.mxu0 %v2220
    %2445 = vmatmul.mubr.bf16.gmra.mrb[0].mxu0 %v2219
    %v2446 = vpop.f32.mrb[0].mxu0
    %v2447 = vadd.f32 %v2258, %v2446
    %v2448 = vpop.f32.mrb[0].mxu0
    %v2449 = vpop.f32.mrb[0].mxu0
    %v2450 = vadd.f32 %v2258, %v2449
    %v2451 = vpop.f32.mrb[0].mxu0
    %2452 = vdwg.mxu0
    %v2453 = vlaneseq
    %v2454 = vand.u32 %v2453, 127
    %vm2455 = vcmp.lt.s32.totalorder %v2454, 24
    %v2456 = vsel %vm2455, %v2391, -inf
    %v2457 = vsel %vm2455, %v2394, -inf
    %v2458 = vsel %vm2455, %v2399, -inf
    %v2459 = vsel %vm2455, %v2402, -inf
    %v2460 = vsel %vm2455, %v2407, -inf
    %v2461 = vsel %vm2455, %v2410, -inf
    %v2462 = vsel %vm2455, %v2415, -inf
    %v2463 = vsel %vm2455, %v2418, -inf
    %v2464 = vsel %vm2455, %v2423, -inf
    %v2465 = vsel %vm2455, %v2426, -inf
    %v2466 = vsel %vm2455, %v2431, -inf
    %v2467 = vsel %vm2455, %v2434, -inf
    %v2468 = vsel %vm2455, %v2439, -inf
    %v2469 = vsel %vm2455, %v2442, -inf
    %v2470 = vsel %vm2455, %v2447, -inf
    %v2471 = vsel %vm2455, %v2450, -inf
    %2472 = vmax.xlane.f32.xlu0 %v2456
    %v2473 = vpop.xlane.xlu0 %2472
    %2474 = vmax.xlane.f32.xlu0 %v2457
    %v2475 = vpop.xlane.xlu0 %2474
    %2476 = vmax.xlane.f32.xlu0 %v2458
    %v2477 = vpop.xlane.xlu0 %2476
    %2478 = vmax.xlane.f32.xlu0 %v2459
    %v2479 = vpop.xlane.xlu0 %2478
    %2480 = vmax.xlane.f32.xlu0 %v2460
    %v2481 = vpop.xlane.xlu0 %2480
    %2482 = vmax.xlane.f32.xlu0 %v2461
    %v2483 = vpop.xlane.xlu0 %2482
    %2484 = vmax.xlane.f32.xlu0 %v2462
    %v2485 = vpop.xlane.xlu0 %2484
    %2486 = vmax.xlane.f32.xlu0 %v2463
    %v2487 = vpop.xlane.xlu0 %2486
    %2488 = vmax.xlane.f32.xlu0 %v2464
    %v2489 = vpop.xlane.xlu0 %2488
    %2490 = vmax.xlane.f32.xlu0 %v2465
    %v2491 = vpop.xlane.xlu0 %2490
    %2492 = vmax.xlane.f32.xlu0 %v2466
    %v2493 = vpop.xlane.xlu0 %2492
    %2494 = vmax.xlane.f32.xlu0 %v2467
    %v2495 = vpop.xlane.xlu0 %2494
    %2496 = vmax.xlane.f32.xlu0 %v2468
    %v2497 = vpop.xlane.xlu0 %2496
    %2498 = vmax.xlane.f32.xlu0 %v2469
    %v2499 = vpop.xlane.xlu0 %2498
    %2500 = vmax.xlane.f32.xlu0 %v2470
    %v2501 = vpop.xlane.xlu0 %2500
    %2502 = vmax.xlane.f32.xlu0 %v2471
    %v2503 = vpop.xlane.xlu0 %2502
    %v2504 = vsub.f32 %v2391, %v2473
    %v2505 = vsub.f32 %v2394, %v2475
    %v2506 = vsub.f32 %v2399, %v2477
    %v2507 = vsub.f32 %v2402, %v2479
    %v2508 = vsub.f32 %v2407, %v2481
    %v2509 = vsub.f32 %v2410, %v2483
    %v2510 = vsub.f32 %v2415, %v2485
    %v2511 = vsub.f32 %v2418, %v2487
    %v2512 = vsub.f32 %v2423, %v2489
    %v2513 = vsub.f32 %v2426, %v2491
    %v2514 = vsub.f32 %v2431, %v2493
    %v2515 = vsub.f32 %v2434, %v2495
    %v2516 = vsub.f32 %v2439, %v2497
    %v2517 = vsub.f32 %v2442, %v2499
    %v2518 = vsub.f32 %v2447, %v2501
    %v2519 = vsub.f32 %v2450, %v2503
    %v2520 = vmul.f32 %v2504, 1.442695
    %v2521 = vpow.pop %v2520
    %v2522 = vmul.f32 %v2505, 1.442695
    %v2523 = vpow.pop %v2522
    %v2524 = vmul.f32 %v2506, 1.442695
    %v2525 = vpow.pop %v2524
    %v2526 = vmul.f32 %v2507, 1.442695
    %v2527 = vpow.pop %v2526
    %v2528 = vmul.f32 %v2508, 1.442695
    %v2529 = vpow.pop %v2528
    %v2530 = vmul.f32 %v2509, 1.442695
    %v2531 = vpow.pop %v2530
    %v2532 = vmul.f32 %v2510, 1.442695
    %v2533 = vpow.pop %v2532
    %v2534 = vmul.f32 %v2511, 1.442695
    %v2535 = vpow.pop %v2534
    %v2536 = vmul.f32 %v2512, 1.442695
    %v2537 = vpow.pop %v2536
    %v2538 = vmul.f32 %v2513, 1.442695
    %v2539 = vpow.pop %v2538
    %v2540 = vmul.f32 %v2514, 1.442695
    %v2541 = vpow.pop %v2540
    %v2542 = vmul.f32 %v2515, 1.442695
    %v2543 = vpow.pop %v2542
    %v2544 = vmul.f32 %v2516, 1.442695
    %v2545 = vpow.pop %v2544
    %v2546 = vmul.f32 %v2517, 1.442695
    %v2547 = vpow.pop %v2546
    %v2548 = vmul.f32 %v2518, 1.442695
    %v2549 = vpow.pop %v2548
    %v2550 = vmul.f32 %v2519, 1.442695
    %v2551 = vpow.pop %v2550
    %v2552 = vsel %vm2455, %v2521, 0.0
    %v2553 = vsel %vm2455, %v2523, 0.0
    %v2554 = vsel %vm2455, %v2525, 0.0
    %v2555 = vsel %vm2455, %v2527, 0.0
    %v2556 = vsel %vm2455, %v2529, 0.0
    %v2557 = vsel %vm2455, %v2531, 0.0
    %v2558 = vsel %vm2455, %v2533, 0.0
    %v2559 = vsel %vm2455, %v2535, 0.0
    %v2560 = vsel %vm2455, %v2537, 0.0
    %v2561 = vsel %vm2455, %v2539, 0.0
    %v2562 = vsel %vm2455, %v2541, 0.0
    %v2563 = vsel %vm2455, %v2543, 0.0
    %v2564 = vsel %vm2455, %v2545, 0.0
    %v2565 = vsel %vm2455, %v2547, 0.0
    %v2566 = vsel %vm2455, %v2549, 0.0
    %v2567 = vsel %vm2455, %v2551, 0.0
    %2568 = vadd.xlane.f32.xlu0 %v2552
    %v2569 = vpop.xlane.xlu0 %2568
    %2570 = vadd.xlane.f32.xlu0 %v2553
    %v2571 = vpop.xlane.xlu0 %2570
    %2572 = vadd.xlane.f32.xlu0 %v2554
    %v2573 = vpop.xlane.xlu0 %2572
    %2574 = vadd.xlane.f32.xlu0 %v2555
    %v2575 = vpop.xlane.xlu0 %2574
    %2576 = vadd.xlane.f32.xlu0 %v2556
    %v2577 = vpop.xlane.xlu0 %2576
    %2578 = vadd.xlane.f32.xlu0 %v2557
    %v2579 = vpop.xlane.xlu0 %2578
    %2580 = vadd.xlane.f32.xlu0 %v2558
    %v2581 = vpop.xlane.xlu0 %2580
    %2582 = vadd.xlane.f32.xlu0 %v2559
    %v2583 = vpop.xlane.xlu0 %2582
    %2584 = vadd.xlane.f32.xlu0 %v2560
    %v2585 = vpop.xlane.xlu0 %2584
    %2586 = vadd.xlane.f32.xlu0 %v2561
    %v2587 = vpop.xlane.xlu0 %2586
    %2588 = vadd.xlane.f32.xlu0 %v2562
    %v2589 = vpop.xlane.xlu0 %2588
    %2590 = vadd.xlane.f32.xlu0 %v2563
    %v2591 = vpop.xlane.xlu0 %2590
    %2592 = vadd.xlane.f32.xlu0 %v2564
    %v2593 = vpop.xlane.xlu0 %2592
    %2594 = vadd.xlane.f32.xlu0 %v2565
    %v2595 = vpop.xlane.xlu0 %2594
    %2596 = vadd.xlane.f32.xlu0 %v2566
    %v2597 = vpop.xlane.xlu0 %2596
    %2598 = vadd.xlane.f32.xlu0 %v2567
    %v2599 = vpop.xlane.xlu0 %2598
    %v2600 = vlog2.pop %v2569
    %v2601 = vmul.f32 %v2600, 0.6931472
    %v2602 = vlog2.pop %v2571
    %v2603 = vmul.f32 %v2602, 0.6931472
    %v2604 = vlog2.pop %v2573
    %v2605 = vmul.f32 %v2604, 0.6931472
    %v2606 = vlog2.pop %v2575
    %v2607 = vmul.f32 %v2606, 0.6931472
    %v2608 = vlog2.pop %v2577
    %v2609 = vmul.f32 %v2608, 0.6931472
    %v2610 = vlog2.pop %v2579
    %v2611 = vmul.f32 %v2610, 0.6931472
    %v2612 = vlog2.pop %v2581
    %v2613 = vmul.f32 %v2612, 0.6931472
    %v2614 = vlog2.pop %v2583
    %v2615 = vmul.f32 %v2614, 0.6931472
    %v2616 = vlog2.pop %v2585
    %v2617 = vmul.f32 %v2616, 0.6931472
    %v2618 = vlog2.pop %v2587
    %v2619 = vmul.f32 %v2618, 0.6931472
    %v2620 = vlog2.pop %v2589
    %v2621 = vmul.f32 %v2620, 0.6931472
    %v2622 = vlog2.pop %v2591
    %v2623 = vmul.f32 %v2622, 0.6931472
    %v2624 = vlog2.pop %v2593
    %v2625 = vmul.f32 %v2624, 0.6931472
    %v2626 = vlog2.pop %v2595
    %v2627 = vmul.f32 %v2626, 0.6931472
    %v2628 = vlog2.pop %v2597
    %v2629 = vmul.f32 %v2628, 0.6931472
    %v2630 = vlog2.pop %v2599
    %v2631 = vmul.f32 %v2630, 0.6931472
    %v2632 = vsub.f32 %v2504, %v2601
    %v2633 = vsub.f32 %v2505, %v2603
    %v2634 = vsub.f32 %v2506, %v2605
    %v2635 = vsub.f32 %v2507, %v2607
    %v2636 = vsub.f32 %v2508, %v2609
    %v2637 = vsub.f32 %v2509, %v2611
    %v2638 = vsub.f32 %v2510, %v2613
    %v2639 = vsub.f32 %v2511, %v2615
    %v2640 = vsub.f32 %v2512, %v2617
    %v2641 = vsub.f32 %v2513, %v2619
    %v2642 = vsub.f32 %v2514, %v2621
    %v2643 = vsub.f32 %v2515, %v2623
    %v2644 = vsub.f32 %v2516, %v2625
    %v2645 = vsub.f32 %v2517, %v2627
    %v2646 = vsub.f32 %v2518, %v2629
    %v2647 = vsub.f32 %v2519, %v2631
    %v2648 = vtanh.pop %v2391
    %v2649 = vtanh.pop %v2394
    %v2650 = vtanh.pop %v2399
    %v2651 = vtanh.pop %v2402
    %v2652 = vtanh.pop %v2407
    %v2653 = vtanh.pop %v2410
    %v2654 = vtanh.pop %v2415
    %v2655 = vtanh.pop %v2418
    %v2656 = vtanh.pop %v2423
    %v2657 = vtanh.pop %v2426
    %v2658 = vtanh.pop %v2431
    %v2659 = vtanh.pop %v2434
    %v2660 = vtanh.pop %v2439
    %v2661 = vtanh.pop %v2442
    %v2662 = vtanh.pop %v2447
    %v2663 = vtanh.pop %v2450
    %vm2664 = vcmp.eq.s32.totalorder %v2454, 24
    %2666 = vset.pattern.permute.xlu0 24
    %2667 = vperm.xlu0 %2666, %v2648
    %v2668 = vpop.permute.xlu0 %2667
    %2671 = vset.pattern.permute.xlu0 24
    %2672 = vperm.xlu0 %2671, %v2649
    %v2673 = vpop.permute.xlu0 %2672
    %2676 = vset.pattern.permute.xlu0 24
    %2677 = vperm.xlu0 %2676, %v2650
    %v2678 = vpop.permute.xlu0 %2677
    %2681 = vset.pattern.permute.xlu0 24
    %2682 = vperm.xlu0 %2681, %v2651
    %v2683 = vpop.permute.xlu0 %2682
    %2686 = vset.pattern.permute.xlu0 24
    %2687 = vperm.xlu0 %2686, %v2652
    %v2688 = vpop.permute.xlu0 %2687
    %2691 = vset.pattern.permute.xlu0 24
    %2692 = vperm.xlu0 %2691, %v2653
    %v2693 = vpop.permute.xlu0 %2692
    %2696 = vset.pattern.permute.xlu0 24
    %2697 = vperm.xlu0 %2696, %v2654
    %v2698 = vpop.permute.xlu0 %2697
    %2701 = vset.pattern.permute.xlu0 24
    %2702 = vperm.xlu0 %2701, %v2655
    %v2703 = vpop.permute.xlu0 %2702
    %2706 = vset.pattern.permute.xlu0 24
    %2707 = vperm.xlu0 %2706, %v2656
    %v2708 = vpop.permute.xlu0 %2707
    %2711 = vset.pattern.permute.xlu0 24
    %2712 = vperm.xlu0 %2711, %v2657
    %v2713 = vpop.permute.xlu0 %2712
    %2716 = vset.pattern.permute.xlu0 24
    %2717 = vperm.xlu0 %2716, %v2658
    %v2718 = vpop.permute.xlu0 %2717
    %2721 = vset.pattern.permute.xlu0 24
    %2722 = vperm.xlu0 %2721, %v2659
    %v2723 = vpop.permute.xlu0 %2722
    %2726 = vset.pattern.permute.xlu0 24
    %2727 = vperm.xlu0 %2726, %v2660
    %v2728 = vpop.permute.xlu0 %2727
    %2731 = vset.pattern.permute.xlu0 24
    %2732 = vperm.xlu0 %2731, %v2661
    %v2733 = vpop.permute.xlu0 %2732
    %2736 = vset.pattern.permute.xlu0 24
    %2737 = vperm.xlu0 %2736, %v2662
    %v2738 = vpop.permute.xlu0 %2737
    %2741 = vset.pattern.permute.xlu0 24
    %2742 = vperm.xlu0 %2741, %v2663
    %v2743 = vpop.permute.xlu0 %2742
    %v2745 = vsel %vm2664, %v2668, 0.0
    %v2746 = vsel %vm2664, %v2673, 0.0
    %v2747 = vsel %vm2664, %v2678, 0.0
    %v2748 = vsel %vm2664, %v2683, 0.0
    %v2749 = vsel %vm2664, %v2688, 0.0
    %v2750 = vsel %vm2664, %v2693, 0.0
    %v2751 = vsel %vm2664, %v2698, 0.0
    %v2752 = vsel %vm2664, %v2703, 0.0
    %v2753 = vsel %vm2664, %v2708, 0.0
    %v2754 = vsel %vm2664, %v2713, 0.0
    %v2755 = vsel %vm2664, %v2718, 0.0
    %v2756 = vsel %vm2664, %v2723, 0.0
    %v2757 = vsel %vm2664, %v2728, 0.0
    %v2758 = vsel %vm2664, %v2733, 0.0
    %v2759 = vsel %vm2664, %v2738, 0.0
    %v2760 = vsel %vm2664, %v2743, 0.0
    %v2761 = vsel %vm2455, %v2632, %v2745
    %v2762 = vsel %vm2455, %v2633, %v2746
    %v2763 = vsel %vm2455, %v2634, %v2747
    %v2764 = vsel %vm2455, %v2635, %v2748
    %v2765 = vsel %vm2455, %v2636, %v2749
    %v2766 = vsel %vm2455, %v2637, %v2750
    %v2767 = vsel %vm2455, %v2638, %v2751
    %v2768 = vsel %vm2455, %v2639, %v2752
    %v2769 = vsel %vm2455, %v2640, %v2753
    %v2770 = vsel %vm2455, %v2641, %v2754
    %v2771 = vsel %vm2455, %v2642, %v2755
    %v2772 = vsel %vm2455, %v2643, %v2756
    %v2773 = vsel %vm2455, %v2644, %v2757
    %v2774 = vsel %vm2455, %v2645, %v2758
    %v2775 = vsel %vm2455, %v2646, %v2759
    %v2776 = vsel %vm2455, %v2647, %v2760
    %v2777 = vpack.c.bf16 %v2762, %v2761
    %v2778 = vpack.c.bf16 %v2764, %v2763
    %v2779 = vpack.c.bf16 %v2766, %v2765
    %v2780 = vpack.c.bf16 %v2768, %v2767
    %v2781 = vpack.c.bf16 %v2770, %v2769
    %v2782 = vpack.c.bf16 %v2772, %v2771
    %v2783 = vpack.c.bf16 %v2774, %v2773
    %v2784 = vpack.c.bf16 %v2776, %v2775
    %v2793 = vunpack.c.l.b16 %v2777
    %v2794 = vunpack.c.h.b16 %v2777
    %v2795 = vunpack.c.l.b16 %v2778
    %v2796 = vunpack.c.h.b16 %v2778
    %v2797 = vunpack.c.l.b16 %v2779
    %v2798 = vunpack.c.h.b16 %v2779
    %v2799 = vunpack.c.l.b16 %v2780
    %v2800 = vunpack.c.h.b16 %v2780
    %v2801 = vunpack.c.l.b16 %v2781
    %v2802 = vunpack.c.h.b16 %v2781
    %v2803 = vunpack.c.l.b16 %v2782
    %v2804 = vunpack.c.h.b16 %v2782
    %v2805 = vunpack.c.l.b16 %v2783
    %v2806 = vunpack.c.h.b16 %v2783
    %v2807 = vunpack.c.l.b16 %v2784
    %v2808 = vunpack.c.h.b16 %v2784
    %v2809 = vpack.c.b16 %v2793, %v2793
    %v2810 = vpack.c.b16 %v2794, %v2794
    %v2811 = vpack.c.b16 %v2795, %v2795
    %v2812 = vpack.c.b16 %v2796, %v2796
    %v2813 = vpack.c.b16 %v2797, %v2797
    %v2814 = vpack.c.b16 %v2798, %v2798
    %v2815 = vpack.c.b16 %v2799, %v2799
    %v2816 = vpack.c.b16 %v2800, %v2800
    %v2817 = vpack.c.b16 %v2801, %v2801
    %v2818 = vpack.c.b16 %v2802, %v2802
    %v2819 = vpack.c.b16 %v2803, %v2803
    %v2820 = vpack.c.b16 %v2804, %v2804
    %v2821 = vpack.c.b16 %v2805, %v2805
    %v2822 = vpack.c.b16 %v2806, %v2806
    %v2823 = vpack.c.b16 %v2807, %v2807
    %v2824 = vpack.c.b16 %v2808, %v2808
    %2841 = vst [vmem:[%s7] sm:$0xf] %v2809
    %2842 = vst [vmem:[%s7 + $0x4] sm:$0xf] %v2810
    %2843 = vst [vmem:[%s7 + $0x8] sm:$0xf] %v2811
    %2844 = vst [vmem:[%s7 + $0xc] sm:$0xf] %v2812
    %2845 = vst [vmem:[%s7 + $0x10] sm:$0xf] %v2813
    %2846 = vst [vmem:[%s7 + $0x14] sm:$0xf] %v2814
    %2847 = vst [vmem:[%s7 + $0x18] sm:$0xf] %v2815
    %2848 = vst [vmem:[%s7 + $0x1c] sm:$0xf] %v2816
    %2849 = vst [vmem:[%s7 + $0x20] sm:$0xf] %v2817
    %2850 = vst [vmem:[%s7 + $0x24] sm:$0xf] %v2818
    %2851 = vst [vmem:[%s7 + $0x28] sm:$0xf] %v2819
    %2852 = vst [vmem:[%s7 + $0x2c] sm:$0xf] %v2820
    %2853 = vst [vmem:[%s7 + $0x30] sm:$0xf] %v2821
    %2854 = vst [vmem:[%s7 + $0x34] sm:$0xf] %v2822
    %2855 = vst [vmem:[%s7 + $0x38] sm:$0xf] %v2823
    %2856 = vst [vmem:[%s7 + $0x3c] sm:$0xf] %v2824
    // Predicated region
    $region38: #{dnb_net_fc_forward.1} parent=1 // pred_check
      _
    $region39: #{dnb_net_fc_forward.1} parent=1 // pred_check_branch
      %2858 = sbr.rel (0) target = $region41
    $region40: #{dnb_net_fc_forward.1} parent=1 // pred_region
      _
    $region41: #{dnb_net_fc_forward.1} parent=1 // pred_fallthru
      _
    // Predicated region
    $region42: #{dnb_net_fc_forward.1} parent=1 // pred_check
      _
    $region43: #{dnb_net_fc_forward.1} parent=1 // pred_check_branch
      %2860 = sbr.rel (0) target = $region45
    $region44: #{dnb_net_fc_forward.1} parent=1 // pred_region
      _
    $region45: #{dnb_net_fc_forward.1} parent=1 // pred_fallthru
      _
    %2861 = vsyncpa [#allocation3], 1
    %2862 = vsyncpa [#allocation5], 1

</llo_original>
